<compile_context>
chip_gen: v5e
topology: v5e:2x2
jax: 0.10.0
libtpu: 0.0.40
codegen_flags: <defaults>
</compile_context>

<pallas_src>
import functools

import jax
import jax.numpy as jnp
from jax import lax
from jax.experimental import pallas as pl
from jax.experimental.pallas import tpu as pltpu


_SQRT_HALF = 0.7071067811865476


def _gelu_exact(x):
    # PyTorch nn.GELU() default is the exact (erf-based) GELU.
    return 0.5 * x * (1.0 + lax.erf(x * _SQRT_HALF))


def _round_up(x, m):
    return (x + m - 1) // m * m


# --------------------------------------------------------------------------- #
# Kernel
# --------------------------------------------------------------------------- #
def _conv_gelu_kernel(x_ref, w_ref, o_ref, cband_ref, patch_ref,
                      *, k, stride, th, wo):
    """One (batch, row-tile) grid step: VMEM im2col patch + ONE MXU matmul.

    x_ref:     (Cin, Hp, Wp)         spatially padded image (per-batch resident)
    w_ref:     (Cout, k*k*Cin + 1)   flattened taps; bias folded as last column
    o_ref:     (Cout, tm)            lane-dense transposed output tile
    cband_ref: (k*Cin, band_h, wo)   column-unfolded input row band   (scratch)
    patch_ref: (k*k*Cin + 1, tm)     im2col patch + trailing ones row (scratch)
    """
    cin = x_ref.shape[0]
    kc = k * cin
    tm = o_ref.shape[1]
    band_h = cband_ref.shape[1]
    tm_real = th * wo

    row_step = th * stride
    row0 = pl.program_id(1) * row_step
    if row_step % 8 == 0:                       # static: sublane-aligned window
        row0 = pl.multiple_of(row0, 8)

    # 1) Column unfold (all j taps; also the stride>1 lane gather) ONCE per
    #    tile: k lane-window copies instead of per-(i, j) work.
    for j in range(k):
        if stride == 1:
            cols = x_ref[:, pl.ds(row0, band_h), pl.ds(j, wo)]
        else:
            cols = x_ref[:, pl.ds(row0, band_h), pl.ds(j, wo, stride)]
        cband_ref[pl.ds(j * cin, cin), :, :] = cols.astype(cband_ref.dtype)

    # 2) Row unfold (i taps): k sublane->lane collapses into the patch.
    #    patch[(i*k + j)*Cin + ci, y*wo + x] = x_pad[ci, row0 + i + y*s, j + x*s]
    for i in range(k):
        if stride == 1:
            band = cband_ref[:, pl.ds(i, th), :]
        else:
            band = cband_ref[:, pl.ds(i, th, stride), :]
        slab = band.reshape(kc, tm_real)
        if tm_real == tm:
            patch_ref[pl.ds(i * kc, kc), :] = slab
        else:                                    # lane-padded fallback tile
            patch_ref[pl.ds(i * kc, kc), pl.ds(0, tm_real)] = slab

    # 3) Ones row: the bias (last weight column) is accumulated by the MXU.
    patch_ref[pl.ds(k * kc, 1), :] = jnp.ones((1, tm), jnp.float32)

    # 4) Single fused MXU matmul over K = k*k*Cin + 1, then exact GELU.
    acc = jnp.dot(w_ref[...], patch_ref[...], preferred_element_type=jnp.float32)
    o_ref[...] = _gelu_exact(acc).astype(o_ref.dtype)


# --------------------------------------------------------------------------- #
# Tiling / VMEM heuristics
# --------------------------------------------------------------------------- #
def _choose_max_lanes(cin, cout, k, soft_bytes=16 << 20):
    """Cap on the output-tile lane width so the tile-dependent VMEM footprint
    (patch scratch + relayout temporaries + double-buffered output blocks)
    stays inside a soft budget.  8-16K lanes amortize the ~0.35us/step grid
    overhead (>=512-wide tiles reach ~85% of HBM roofline)."""
    K = k * k * cin + 1
    bytes_per_lane = 4 * (2 * _round_up(K, 8) + 2 * _round_up(cout, 8))
    lanes = (soft_bytes // bytes_per_lane) // 128 * 128
    return int(max(128, min(16384, lanes)))


def _pick_row_tile(ho, wo, n_batch, stride, max_lanes):
    """Pick (th, tm): th | Ho output rows per tile, tm = output-block lane width.

    tm is ALWAYS a multiple of 128 (lane-dense, unmasked stores): either
    th*wo % 128 == 0, or (fallback) th == Ho with tm = round_up(Ho*Wo, 128) and
    the extra lanes sliced off in the wrapper.  Prefers th*stride % 8 == 0
    (sublane-aligned row windows) and, for batch == 1, >= 2 row tiles so both
    TensorCores of a megacore / v7x part get parallel grid steps.
    """
    divs = [d for d in range(1, ho + 1) if ho % d == 0 and (d * wo) % 128 == 0]
    cands = [d for d in divs if d * wo <= max_lanes]
    if cands:
        if n_batch == 1:
            multi = [d for d in cands if ho // d >= 2]
            if multi:
                cands = multi
        aligned = [d for d in cands if (d * stride) % 8 == 0]
        pool = aligned if aligned else cands
        th = max(pool)
        return th, th * wo
    if divs:                       # lane-dense divisors exist but exceed the cap
        th = min(divs)
        return th, th * wo
    # No divisor is lane-dense: one tile over all rows, flat dim padded to 128.
    return ho, _round_up(ho * wo, 128)


def _estimate_vmem_bytes(cin, cout, hp, wp, k, K, band_h, wo, tm):
    """Approximate (8,128)-padded VMEM footprint of the pallas_call, in bytes."""
    f32 = 4
    x_blk = 2 * cin * _round_up(hp, 8) * _round_up(wp, 128) * f32   # dbl-buffered
    w_blk = 2 * _round_up(cout, 8) * _round_up(K, 128) * f32
    o_blk = 2 * _round_up(cout, 8) * _round_up(tm, 128) * f32
    cband = k * cin * _round_up(band_h, 8) * _round_up(wo, 128) * f32
    patch = _round_up(K, 8) * _round_up(tm, 128) * f32
    temps = patch                                     # relayout temporaries
    return x_blk + w_blk + o_blk + cband + patch + temps


def _vmem_limit_bytes(required):
    """Scoped-VMEM limit derived from the real footprint, capped by the part's
    physical per-core VMEM (128 MiB on v5e/v6e, 64 MiB on v7x)."""
    cap = 64 << 20                                    # conservative default: v7x
    try:
        info = pltpu.get_tpu_info()
        cap = int(getattr(info, "vmem_capacity_bytes", cap)) or cap
    except Exception:
        pass
    want = int(required * 1.5) + (4 << 20)
    want = max(want, 32 << 20)
    return int(min(want, int(cap * 0.75)))


# --------------------------------------------------------------------------- #
# Wrapper
# --------------------------------------------------------------------------- #
@functools.partial(jax.jit, static_argnames=("kernel_size", "stride"))
def basic_conv_forward(x_nchw, weight, bias, *, kernel_size, stride):
    """BasicConv forward: GELU(Conv2d(x, W, b, stride, padding=k//2)).

    x_nchw: (N, Cin, H, W)       PyTorch layout (kept: no NHWC transpose)
    weight: (Cout, Cin, kh, kw)  PyTorch Conv2d weight layout
    bias:   (Cout,)
    Returns (N, Cout, Ho, Wo).
    """
    n, cin, h, w = x_nchw.shape
    cout = weight.shape[0]
    k = kernel_size
    pad = k // 2
    ho = (h + 2 * pad - k) // stride + 1
    wo = (w + 2 * pad - k) // stride + 1
    hp, wp = h + 2 * pad, w + 2 * pad

    # Only wrapper-side HBM pass over the activation: spatial zero-pad (NCHW).
    x_pad = jnp.pad(x_nchw, ((0, 0), (0, 0), (pad, pad), (pad, pad)))

    # Taps flattened to (Cout, k*k*Cin) in (i, j, ci) order; bias appended as
    # the last column so it is accumulated inside the single MXU matmul.
    K = k * k * cin + 1
    w_mat = jnp.transpose(weight, (0, 2, 3, 1)).reshape(cout, k * k * cin)
    w_mat = jnp.concatenate([w_mat, bias.reshape(cout, 1)], axis=1)
    w_mat = w_mat.astype(jnp.float32)

    max_lanes = _choose_max_lanes(cin, cout, k)
    th, tm = _pick_row_tile(ho, wo, n, stride, max_lanes)
    n_rt = ho // th
    band_h = (th - 1) * stride + k

    vmem_need = _estimate_vmem_bytes(cin, cout, hp, wp, k, K, band_h, wo, tm)
    vmem_limit = _vmem_limit_bytes(vmem_need)
    # TODO(synk): if the resident padded image alone exceeds the VMEM budget
    # (large Cin*Hp*Wp, esp. v7x's 64 MiB/core), switch in_specs[0] to
    # memory_space=pl.ANY and manually double-buffer a (Cin, band_h, Wp) halo
    # row band per tile with pltpu.make_async_copy (pattern P4).

    kern = functools.partial(_conv_gelu_kernel, k=k, stride=stride, th=th, wo=wo)

    out_flat = pl.pallas_call(
        kern,
        out_shape=jax.ShapeDtypeStruct((n, cout, n_rt * tm), x_nchw.dtype),
        grid_spec=pltpu.PrefetchScalarGridSpec(
            num_scalar_prefetch=0,
            grid=(n, n_rt),
            in_specs=[
                # Whole padded image, resident across the row-tile axis
                # (same block index for every r -> no re-DMA within a batch).
                pl.BlockSpec((None, cin, hp, wp), lambda b, r: (b, 0, 0, 0)),
                # Flattened taps + bias column (tiny, resident).
                pl.BlockSpec((cout, K), lambda b, r: (0, 0)),
            ],
            # Transposed, lane-dense (tm % 128 == 0) output block; the flat
            # spatial dim reshapes back to NCHW for free in the wrapper.
            out_specs=pl.BlockSpec((None, cout, tm), lambda b, r: (b, 0, r)),
            scratch_shapes=[
                pltpu.VMEM((k * cin, band_h, wo), jnp.float32),   # column band
                pltpu.VMEM((K, tm), jnp.float32),                 # im2col patch
            ]),
        compiler_params=pltpu.CompilerParams(
            dimension_semantics=("parallel", "parallel"),
            vmem_limit_bytes=vmem_limit),
    )(x_pad, w_mat)

    if n_rt * tm != ho * wo:                    # lane-padded fallback: drop pad
        out_flat = out_flat[:, :, :ho * wo]
    return out_flat.reshape(n, cout, ho, wo)    # contiguous -> free reshape


# --------------------------------------------------------------------------- #
# Demo / self-check
# --------------------------------------------------------------------------- #
if __name__ == "__main__":
    # BasicConv(in_channel=4, out_channel=8, kernel_size=3, stride=1)
    in_channel, out_channel, kernel_size, stride = 4, 8, 3, 1
    N, H, W = 2, 16, 16

    key = jax.random.PRNGKey(0)
    kx, kw, kb = jax.random.split(key, 3)
    x = jax.random.normal(kx, (N, in_channel, H, W), dtype=jnp.float32)
    # Deterministic synthetic Conv2d parameters (PyTorch-style init bounds).
    fan_in = in_channel * kernel_size * kernel_size
    bound = 1.0 / (fan_in ** 0.5)
    weight = jax.random.uniform(
        kw, (out_channel, in_channel, kernel_size, kernel_size),
        minval=-bound, maxval=bound, dtype=jnp.float32)
    bias = jax.random.uniform(
        kb, (out_channel,), minval=-bound, maxval=bound, dtype=jnp.float32)

    out = basic_conv_forward(x, weight, bias,
                             kernel_size=kernel_size, stride=stride)
    out = jax.block_until_ready(out)

    # Sanity check against a pure-JAX reference (conv + bias + exact GELU).
    ref_conv = lax.conv_general_dilated(
        x, weight, window_strides=(stride, stride),
        padding=[(kernel_size // 2, kernel_size // 2)] * 2,
        dimension_numbers=("NCHW", "OIHW", "NCHW"))
    ref = jax.nn.gelu(ref_conv + bias[None, :, None, None], approximate=False)
    assert out.shape == (N, out_channel, H, W)
    assert jnp.allclose(out, ref, atol=1e-5, rtol=1e-5), "mismatch vs reference"

    print("KERNEL_OK")
</pallas_src>

<mosaic_0001>
module attributes {stable_mosaic.version = 11 : i64} {
  func.func @_conv_gelu_kernel(%arg0: i32, %arg1: i32, %arg2: memref<1x4x18x18xf32, #tpu.memory_space<vmem>>, %arg3: memref<8x37xf32, #tpu.memory_space<vmem>>, %arg4: memref<1x8x256xf32, #tpu.memory_space<vmem>>, %arg5: memref<12x18x16xf32, #tpu.memory_space<vmem>>, %arg6: memref<37x256xf32, #tpu.memory_space<vmem>>) attributes {dimension_semantics = [#tpu.dimension_semantics<parallel>, #tpu.dimension_semantics<parallel>], iteration_bounds = array<i64: 2, 1>, scalar_prefetch = 0 : i64, scratch_operands = 2 : i64, tpu.core_type = #tpu.core_type<tc>, window_params = [{transform_indices = @transform_0, window_bounds = array<i64: 1, 4, 18, 18>}, {pipeline_mode = #tpu.pipeline_mode<synchronous>, transform_indices = @transform_1, window_bounds = array<i64: 8, 37>}, {transform_indices = @transform_2, window_bounds = array<i64: 1, 8, 256>}]} {
    %c16_i32 = arith.constant 16 : i32
    %0 = arith.muli %arg1, %c16_i32 : i32
    %1 = tpu.assume_multiple %0, 8 : i32
    %c0 = arith.constant 0 : index
    %c0_0 = arith.constant 0 : index
    %2 = arith.index_cast %1 : i32 to index
    %c0_1 = arith.constant 0 : index
    %3 = vector.load %arg2[%c0, %c0_0, %2, %c0_1] : memref<1x4x18x18xf32, #tpu.memory_space<vmem>>, vector<1x4x18x16xf32>
    %4 = vector.shape_cast %3 : vector<1x4x18x16xf32> to vector<4x18x16xf32>
    %c0_2 = arith.constant 0 : index
    %c0_3 = arith.constant 0 : index
    %c0_4 = arith.constant 0 : index
    %5 = vector.load %arg5[%c0_2, %c0_3, %c0_4] : memref<12x18x16xf32, #tpu.memory_space<vmem>>, vector<4x18x16xf32>
    tpu.vector_store %arg5[%c0_2, %c0_3, %c0_4], %4 {strides = array<i32>} : memref<12x18x16xf32, #tpu.memory_space<vmem>>, vector<4x18x16xf32>,
    %c0_5 = arith.constant 0 : index
    %c0_6 = arith.constant 0 : index
    %6 = arith.index_cast %1 : i32 to index
    %c1 = arith.constant 1 : index
    %7 = vector.load %arg2[%c0_5, %c0_6, %6, %c1] : memref<1x4x18x18xf32, #tpu.memory_space<vmem>>, vector<1x4x18x16xf32>
    %8 = vector.shape_cast %7 : vector<1x4x18x16xf32> to vector<4x18x16xf32>
    %c4 = arith.constant 4 : index
    %c0_7 = arith.constant 0 : index
    %c0_8 = arith.constant 0 : index
    %9 = vector.load %arg5[%c4, %c0_7, %c0_8] : memref<12x18x16xf32, #tpu.memory_space<vmem>>, vector<4x18x16xf32>
    tpu.vector_store %arg5[%c4, %c0_7, %c0_8], %8 {strides = array<i32>} : memref<12x18x16xf32, #tpu.memory_space<vmem>>, vector<4x18x16xf32>,
    %c0_9 = arith.constant 0 : index
    %c0_10 = arith.constant 0 : index
    %10 = arith.index_cast %1 : i32 to index
    %c2 = arith.constant 2 : index
    %11 = vector.load %arg2[%c0_9, %c0_10, %10, %c2] : memref<1x4x18x18xf32, #tpu.memory_space<vmem>>, vector<1x4x18x16xf32>
    %12 = vector.shape_cast %11 : vector<1x4x18x16xf32> to vector<4x18x16xf32>
    %c8 = arith.constant 8 : index
    %c0_11 = arith.constant 0 : index
    %c0_12 = arith.constant 0 : index
    %13 = vector.load %arg5[%c8, %c0_11, %c0_12] : memref<12x18x16xf32, #tpu.memory_space<vmem>>, vector<4x18x16xf32>
    tpu.vector_store %arg5[%c8, %c0_11, %c0_12], %12 {strides = array<i32>} : memref<12x18x16xf32, #tpu.memory_space<vmem>>, vector<4x18x16xf32>,
    %c0_13 = arith.constant 0 : index
    %c0_14 = arith.constant 0 : index
    %c0_15 = arith.constant 0 : index
    %14 = vector.load %arg5[%c0_13, %c0_14, %c0_15] : memref<12x18x16xf32, #tpu.memory_space<vmem>>, vector<12x16x16xf32>
    %15 = vector.shape_cast %14 : vector<12x16x16xf32> to vector<12x256xf32>
    %c0_16 = arith.constant 0 : index
    %c0_17 = arith.constant 0 : index
    %16 = vector.load %arg6[%c0_16, %c0_17] : memref<37x256xf32, #tpu.memory_space<vmem>>, vector<12x256xf32>
    tpu.vector_store %arg6[%c0_16, %c0_17], %15 {strides = array<i32>} : memref<37x256xf32, #tpu.memory_space<vmem>>, vector<12x256xf32>,
    %c0_18 = arith.constant 0 : index
    %c1_19 = arith.constant 1 : index
    %c0_20 = arith.constant 0 : index
    %17 = vector.load %arg5[%c0_18, %c1_19, %c0_20] : memref<12x18x16xf32, #tpu.memory_space<vmem>>, vector<12x16x16xf32>
    %18 = vector.shape_cast %17 : vector<12x16x16xf32> to vector<12x256xf32>
    %c12 = arith.constant 12 : index
    %c0_21 = arith.constant 0 : index
    %19 = vector.load %arg6[%c12, %c0_21] : memref<37x256xf32, #tpu.memory_space<vmem>>, vector<12x256xf32>
    tpu.vector_store %arg6[%c12, %c0_21], %18 {strides = array<i32>} : memref<37x256xf32, #tpu.memory_space<vmem>>, vector<12x256xf32>,
    %c0_22 = arith.constant 0 : index
    %c2_23 = arith.constant 2 : index
    %c0_24 = arith.constant 0 : index
    %20 = vector.load %arg5[%c0_22, %c2_23, %c0_24] : memref<12x18x16xf32, #tpu.memory_space<vmem>>, vector<12x16x16xf32>
    %21 = vector.shape_cast %20 : vector<12x16x16xf32> to vector<12x256xf32>
    %c24 = arith.constant 24 : index
    %c0_25 = arith.constant 0 : index
    %22 = vector.load %arg6[%c24, %c0_25] : memref<37x256xf32, #tpu.memory_space<vmem>>, vector<12x256xf32>
    tpu.vector_store %arg6[%c24, %c0_25], %21 {strides = array<i32>} : memref<37x256xf32, #tpu.memory_space<vmem>>, vector<12x256xf32>,
    %cst = arith.constant 1.000000e+00 : f32
    %23 = vector.broadcast %cst : f32 to vector<1x256xf32>
    %c36 = arith.constant 36 : index
    %c0_26 = arith.constant 0 : index
    %24 = vector.load %arg6[%c36, %c0_26] : memref<37x256xf32, #tpu.memory_space<vmem>>, vector<1x256xf32>
    tpu.vector_store %arg6[%c36, %c0_26], %23 {strides = array<i32>} : memref<37x256xf32, #tpu.memory_space<vmem>>, vector<1x256xf32>,
    %c0_27 = arith.constant 0 : index
    %c0_28 = arith.constant 0 : index
    %25 = vector.load %arg3[%c0_27, %c0_28] : memref<8x37xf32, #tpu.memory_space<vmem>>, vector<8x37xf32>
    %c0_29 = arith.constant 0 : index
    %c0_30 = arith.constant 0 : index
    %26 = vector.load %arg6[%c0_29, %c0_30] : memref<37x256xf32, #tpu.memory_space<vmem>>, vector<37x256xf32>
    %cst_31 = arith.constant dense<0.000000e+00> : vector<8x256xf32>
    %27 = tpu.matmul %25, %26, %cst_31 {dimension_numbers = #tpu.dot_dimension_numbers<[1], [0], [0], [1], [0, 0, 1, 1], [], []>} : vector<8x37xf32>, vector<37x256xf32>, vector<8x256xf32> -> vector<8x256xf32>
    %cst_32 = arith.constant 5.000000e-01 : f32
    %28 = vector.broadcast %cst_32 : f32 to vector<8x256xf32>
    %29 = arith.mulf %28, %27 : vector<8x256xf32>
    %cst_33 = arith.constant 0.707106769 : f32
    %30 = vector.broadcast %cst_33 : f32 to vector<8x256xf32>
    %31 = arith.mulf %27, %30 : vector<8x256xf32>
    %32 = math.erf %31 : vector<8x256xf32>
    %cst_34 = arith.constant 1.000000e+00 : f32
    %33 = vector.broadcast %cst_34 : f32 to vector<8x256xf32>
    %34 = arith.addf %33, %32 : vector<8x256xf32>
    %35 = arith.mulf %29, %34 : vector<8x256xf32>
    %c0_35 = arith.constant 0 : index
    %c0_36 = arith.constant 0 : index
    %c0_37 = arith.constant 0 : index
    %36 = vector.load %arg4[%c0_35, %c0_36, %c0_37] : memref<1x8x256xf32, #tpu.memory_space<vmem>>, vector<1x8x256xf32>
    %37 = vector.shape_cast %36 : vector<1x8x256xf32> to vector<8x256xf32>
    %38 = vector.shape_cast %35 : vector<8x256xf32> to vector<1x8x256xf32>
    tpu.vector_store %arg4[%c0_35, %c0_36, %c0_37], %38 {strides = array<i32>} : memref<1x8x256xf32, #tpu.memory_space<vmem>>, vector<1x8x256xf32>,
    return
  }
  func.func @transform_0(%arg0: i32, %arg1: i32) -> (i32, i32, i32, i32) {
    %c0_i32 = arith.constant 0 : i32
    %c0_i32_0 = arith.constant 0 : i32
    %c0_i32_1 = arith.constant 0 : i32
    %c0_i32_2 = arith.constant 0 : i32
    return %arg0, %c0_i32, %c0_i32_0, %c0_i32_1 : i32, i32, i32, i32
  }
  func.func @transform_1(%arg0: i32, %arg1: i32) -> (i32, i32) {
    %c0_i32 = arith.constant 0 : i32
    %c0_i32_0 = arith.constant 0 : i32
    %c0_i32_1 = arith.constant 0 : i32
    return %c0_i32, %c0_i32_0 : i32, i32
  }
  func.func @transform_2(%arg0: i32, %arg1: i32) -> (i32, i32, i32) {
    %c0_i32 = arith.constant 0 : i32
    %c0_i32_0 = arith.constant 0 : i32
    return %arg0, %c0_i32, %arg1 : i32, i32, i32
  }
}

</mosaic_0001>

<llo_original>
// kernel: basic_conv_forward.1
$region0: #{basic_conv_forward.1}
  #allocation0 [shape = 'u32[]', space=smem, size = 0x4, offset = 0x4, fixed_abs, tag = 'smem constant byte address 0x4 - core index']
  #allocation1 [shape = 'u32[72,128]{1,0:T(1,128)}', space=vmem, size = 0x9000, scoped, tag = 'internal scratch']
  #allocation2 [shape = 'f32[12,18,16]{2,1,0:T(8,128)}', space=vmem, size = 0x24000, scoped, tag = 'scratch operand']
  #allocation3 [shape = 'f32[37,256]{1,0:T(8,128)}', space=vmem, size = 0xa000, scoped, tag = 'scratch operand']
  %s0 = inlined_call_operand.vmem [shape: f32[2,4,18,18], index: 0, kind: input, shape index: {}]
  %s1 = inlined_call_operand.vmem [shape: f32[8,37], index: 1, kind: input, shape index: {}]
  %s2 = inlined_call_operand.vmem [shape: f32[2,8,256], index: 2, kind: output, shape index: {}]
  %s3 = sld [smem:[#allocation0]]
  $region41: #{basic_conv_forward.1} parent=0
    _
  %s5 = ssub.s32 1, %s3
  %s6 = scalar_select 0, %s5, %s3
  loop: start=0, step=1, limit=4
  $region2: #{basic_conv_forward.1} parent=0 // loop_pre_header
    _
  $region3: #{basic_conv_forward.1} parent=0 // loop_header
    %s8 = sphi 0, %s12
    %p9 = scmp.ge.s32.totalorder %s8, 4
    %s15 = sphi 0, %s27
    %s16 = sphi 0, %s23
    %s17 = sphi 0, %s15
    %s18 = sphi 0, %s16
    %s19 = sphi 0, %s17
    %s20 = sphi 0, %s18
    %s30 = sphi 0, %s32
    %s33 = sphi 0, %s30
    %s34 = sphi 0, %s33
    %s50 = sphi 0, %s34
    %s54 = sphi 0, %s54
    %s56 = sphi 0, %s54
    %s57 = sphi 0, %s56
    %s71 = sphi 0, %s57
    %s79 = sphi 0, %s81
    %s82 = sphi 0, %s79
    %s83 = sphi 0, %s82
    %s99 = sphi 0, %s83
  $region4: #{basic_conv_forward.1} parent=0 // loop_header_branch
    %11 = sbr.rel (%p9) target = $region8
  $region5: #{basic_conv_forward.1} parent=0 // loop_body
    %s13 = ssub.s32 %s8, 1
    %s14 = ssub.s32 %s8, 2
    %s21 = sadd.s32 1, %s16
    %p22 = scmp.ge.s32.totalorder %s21, 1
    %s23 = scalar_select %p22, 0, %s21
    %s24 = sadd.s32 1, %s15
    %s25 = scalar_select %p22, %s24, %s15
    %p26 = scmp.ge.s32.totalorder %s25, 2
    %s27 = scalar_select %p26, 0, %s25
    %s28 = ssub.s32 %s15, %s27
    %p29 = scmp.eq.s32.totalorder %s28, 0
    %s31 = sadd.s32 %s30, 1
    %s32 = scalar_select %p29, %s30, %s31
    %p35 = pneg %p29
    %p36 = scmp.eq.s32.totalorder %s8, 1
    %p37 = por %p35, %p36
    %p38 = scmp.ne.s32.totalorder %s30, %s33
    %p39 = scmp.eq.s32.totalorder %s8, 0
    %p40 = por %p38, %p39
    %p41 = scmp.ne.s32.totalorder %s30, %s33
    %p42 = scmp.eq.s32.totalorder %s13, 1
    %p43 = por %p41, %p42
    %p44 = scmp.ne.s32.totalorder %s33, %s34
    %p45 = scmp.eq.s32.totalorder %s13, 0
    %p46 = por %p44, %p45
    %p47 = scmp.ne.s32.totalorder %s33, %s34
    %p48 = scmp.eq.s32.totalorder %s14, 1
    %p49 = por %p47, %p48
    %p51 = scmp.ne.s32.totalorder %s34, %s50
    %p52 = scmp.eq.s32.totalorder %s14, 0
    %p53 = por %p51, %p52
    %s55 = sadd.s32 %s54, 1
    %p58 = scmp.eq.s32.totalorder %s8, 1
    %p59 = scmp.ne.s32.totalorder %s54, %s56
    %p60 = scmp.eq.s32.totalorder %s8, 0
    %p61 = por %p59, %p60
    %p62 = scmp.ne.s32.totalorder %s54, %s56
    %p63 = scmp.eq.s32.totalorder %s13, 1
    %p64 = por %p62, %p63
    %p65 = scmp.ne.s32.totalorder %s56, %s57
    %p66 = scmp.eq.s32.totalorder %s13, 0
    %p67 = por %p65, %p66
    %p68 = scmp.ne.s32.totalorder %s56, %s57
    %p69 = scmp.eq.s32.totalorder %s14, 1
    %p70 = por %p68, %p69
    %p72 = scmp.ne.s32.totalorder %s57, %s71
    %p73 = scmp.eq.s32.totalorder %s14, 0
    %p74 = por %p72, %p73
    %s75 = ssub.s32 %s15, %s27
    %s76 = ssub.s32 %s16, %s23
    %s77 = sor.u32 %s75, %s76
    %p78 = scmp.eq.s32.totalorder %s77, 0
    %s80 = sadd.s32 %s79, 1
    %s81 = scalar_select %p78, %s79, %s80
    %p84 = pneg %p78
    %p85 = scmp.eq.s32.totalorder %s8, 1
    %p86 = por %p84, %p85
    %p87 = scmp.ne.s32.totalorder %s79, %s82
    %p88 = scmp.eq.s32.totalorder %s8, 0
    %p89 = por %p87, %p88
    %p90 = scmp.ne.s32.totalorder %s79, %s82
    %p91 = scmp.eq.s32.totalorder %s13, 1
    %p92 = por %p90, %p91
    %p93 = scmp.ne.s32.totalorder %s82, %s83
    %p94 = scmp.eq.s32.totalorder %s13, 0
    %p95 = por %p93, %p94
    %p96 = scmp.ne.s32.totalorder %s82, %s83
    %p97 = scmp.eq.s32.totalorder %s14, 1
    %p98 = por %p96, %p97
    %p100 = scmp.ne.s32.totalorder %s83, %s99
    %p101 = scmp.eq.s32.totalorder %s14, 0
    %p102 = por %p100, %p101
    %p103 = scmp.le.s32.totalorder 1, %s8
    %p104 = scmp.lt.s32.totalorder %s8, 3
    %p105 = pnand %p103, %p104
    %p106 = pneg %p105
    // Predicated region
    $region9: #{basic_conv_forward.1} parent=5 // pred_check
      _
    $region10: #{basic_conv_forward.1} parent=5 // pred_check_branch
      %108 = sbr.rel (%p105) target = $region12
    $region11: #{basic_conv_forward.1} parent=5 // pred_region
      %s109 = ssub.s32 %s8, 1
      // Predicated region
      $region13: #{basic_conv_forward.1} parent=11 // pred_check
        %p110 = pneg %p67
      $region14: #{basic_conv_forward.1} parent=11 // pred_check_branch
        %112 = sbr.rel (%p110) target = $region16
      $region15: #{basic_conv_forward.1} parent=11 // pred_region
        _
      $region16: #{basic_conv_forward.1} parent=11 // pred_fallthru
        _
    $region12: #{basic_conv_forward.1} parent=5 // pred_fallthru
      _
    %p113 = scmp.lt.s32.totalorder %s8, 2
    // Predicated region
    $region17: #{basic_conv_forward.1} parent=5 // pred_check
      %p114 = pneg %p113
    $region18: #{basic_conv_forward.1} parent=5 // pred_check_branch
      %116 = sbr.rel (%p114) target = $region20
    $region19: #{basic_conv_forward.1} parent=5 // pred_region
      // Predicated region
      $region21: #{basic_conv_forward.1} parent=19 // pred_check
        %p117 = pneg %p40
      $region22: #{basic_conv_forward.1} parent=19 // pred_check_branch
        %119 = sbr.rel (%p117) target = $region24
      $region23: #{basic_conv_forward.1} parent=19 // pred_region
        %p120 = scmp.lt.s32.totalorder %s15, 1
        %s121 = scalar_select %p120, %s15, 1
        %s122 = smul.addr %s121, 12
        %s123 = smul.addr %s122, 8
        %s124 = scalar_lea.vmem %s0, %s123
      $region24: #{basic_conv_forward.1} parent=19 // pred_fallthru
        _
    $region20: #{basic_conv_forward.1} parent=5 // pred_fallthru
      _
    %p125 = scmp.le.s32.totalorder 1, %s8
    %p126 = scmp.lt.s32.totalorder %s8, 3
    %p127 = pnand %p125, %p126
    %p128 = pneg %p127
    // Predicated region
    $region25: #{basic_conv_forward.1} parent=5 // pred_check
      _
    $region26: #{basic_conv_forward.1} parent=5 // pred_check_branch
      %130 = sbr.rel (%p127) target = $region28
    $region27: #{basic_conv_forward.1} parent=5 // pred_region
      %s131 = ssub.s32 %s8, 1
      %p132 = scmp.lt.s32.totalorder %s17, 1
      %s133 = scalar_select %p132, %s17, 1
      %s134 = smul.addr %s133, 12
      %s135 = smul.addr %s134, 8
      %s136 = scalar_lea.vmem %s0, %s135
      %p137 = pneg %p46
      %p138 = pneg %p43
      %p139 = pneg %p67
      %p140 = pneg %p64
      %p141 = pneg %p95
      %p142 = pneg %p92
      %s143 = smul.u32 2, %s18
      %p144 = scmp.lt.s32.totalorder %s17, 1
      %s145 = scalar_select %p144, %s17, 1
      %p146 = scmp.lt.s32.totalorder %s143, 1
      %s147 = scalar_select %p146, %s143, 1
      %s148 = smul.addr %s145, 2
      %s149 = sadd.s32 %s147, %s148
      %s150 = smul.addr %s149, 8
      %s151 = scalar_lea.vmem %s2, %s150
      %p152 = scmp.lt.s32.totalorder %s17, 1
      %s153 = scalar_select %p152, %s17, 1
      %s154 = smul.addr %s153, 12
      %s155 = smul.addr %s154, 8
      %s156 = scalar_lea.vmem %s0, %s155
      %s157 = smul.u32 2, %s18
      %p158 = scmp.lt.s32.totalorder %s17, 1
      %s159 = scalar_select %p158, %s17, 1
      %p160 = scmp.lt.s32.totalorder %s157, 1
      %s161 = scalar_select %p160, %s157, 1
      %s162 = smul.addr %s159, 2
      %s163 = sadd.s32 %s161, %s162
      %s164 = smul.addr %s163, 8
      %s165 = scalar_lea.vmem %s2, %s164
      %s166 = smul.u32 2, %s18
      %s167 = smul.u32 %s18, 16
      %s168 = scalar_lea.vmem %s156, %s167
      %v169 = vld [vmem:[%s168] sm:$0xff]
      %v170 = vld [vmem:[%s168 + $0x8] sm:$0xff]
      %v171 = vld [vmem:[%s168 + $0x10] sm:$0x3]
      %v172 = vld [vmem:[%s168 + $0x18] sm:$0xff]
      %v173 = vld [vmem:[%s168 + $0x20] sm:$0xff]
      %v174 = vld [vmem:[%s168 + $0x28] sm:$0x3]
      %v175 = vld [vmem:[%s168 + $0x30] sm:$0xff]
      %v176 = vld [vmem:[%s168 + $0x38] sm:$0xff]
      %v177 = vld [vmem:[%s168 + $0x40] sm:$0x3]
      %v178 = vld [vmem:[%s168 + $0x48] sm:$0xff]
      %v179 = vld [vmem:[%s168 + $0x50] sm:$0xff]
      %v180 = vld [vmem:[%s168 + $0x58] sm:$0x3]
      %vm181 = vcmask 130048
      %182 = vst.msk [vmem:[#allocation2] sm:$0xff] %vm181, %v169
      %183 = vst.msk [vmem:[#allocation2 + $0x8] sm:$0xff] %vm181, %v170
      %vm184 = vcmask 123904
      %185 = vst.msk [vmem:[#allocation2 + $0x10] sm:$0x3] %vm184, %v171
      %186 = vst.msk [vmem:[#allocation2 + $0x18] sm:$0xff] %vm181, %v172
      %187 = vst.msk [vmem:[#allocation2 + $0x20] sm:$0xff] %vm181, %v173
      %188 = vst.msk [vmem:[#allocation2 + $0x28] sm:$0x3] %vm184, %v174
      %189 = vst.msk [vmem:[#allocation2 + $0x30] sm:$0xff] %vm181, %v175
      %190 = vst.msk [vmem:[#allocation2 + $0x38] sm:$0xff] %vm181, %v176
      %191 = vst.msk [vmem:[#allocation2 + $0x40] sm:$0x3] %vm184, %v177
      %192 = vst.msk [vmem:[#allocation2 + $0x48] sm:$0xff] %vm181, %v178
      %193 = vst.msk [vmem:[#allocation2 + $0x50] sm:$0xff] %vm181, %v179
      %194 = vst.msk [vmem:[#allocation2 + $0x58] sm:$0x3] %vm184, %v180
      %v195 = vld [vmem:[%s168] sm:$0xff]
      %v196 = vld [vmem:[%s168 + $0x8] sm:$0xff]
      %v197 = vld [vmem:[%s168 + $0x10] sm:$0x3]
      %v198 = vld [vmem:[%s168 + $0x18] sm:$0xff]
      %v199 = vld [vmem:[%s168 + $0x20] sm:$0xff]
      %v200 = vld [vmem:[%s168 + $0x28] sm:$0x3]
      %v201 = vld [vmem:[%s168 + $0x30] sm:$0xff]
      %v202 = vld [vmem:[%s168 + $0x38] sm:$0xff]
      %v203 = vld [vmem:[%s168 + $0x40] sm:$0x3]
      %v204 = vld [vmem:[%s168 + $0x48] sm:$0xff]
      %v205 = vld [vmem:[%s168 + $0x50] sm:$0xff]
      %v206 = vld [vmem:[%s168 + $0x58] sm:$0x3]
      %219 = vrot.lane.b32.xlu0 %v195, 127
      %v220 = vpop.permute.xlu0 %219
      %221 = vrot.lane.b32.xlu0 %v196, 127
      %v222 = vpop.permute.xlu0 %221
      %223 = vrot.lane.b32.xlu0 %v197, 127
      %v224 = vpop.permute.xlu0 %223
      %225 = vrot.lane.b32.xlu0 %v198, 127
      %v226 = vpop.permute.xlu0 %225
      %227 = vrot.lane.b32.xlu0 %v199, 127
      %v228 = vpop.permute.xlu0 %227
      %229 = vrot.lane.b32.xlu0 %v200, 127
      %v230 = vpop.permute.xlu0 %229
      %231 = vrot.lane.b32.xlu0 %v201, 127
      %v232 = vpop.permute.xlu0 %231
      %233 = vrot.lane.b32.xlu0 %v202, 127
      %v234 = vpop.permute.xlu0 %233
      %235 = vrot.lane.b32.xlu0 %v203, 127
      %v236 = vpop.permute.xlu0 %235
      %237 = vrot.lane.b32.xlu0 %v204, 127
      %v238 = vpop.permute.xlu0 %237
      %239 = vrot.lane.b32.xlu0 %v205, 127
      %v240 = vpop.permute.xlu0 %239
      %241 = vrot.lane.b32.xlu0 %v206, 127
      %v242 = vpop.permute.xlu0 %241
      %s255 = scalar_lea.vmem [#allocation2], 96
      %256 = vst.msk [vmem:[%s255] sm:$0xff] %vm181, %v220
      %257 = vst.msk [vmem:[%s255 + $0x8] sm:$0xff] %vm181, %v222
      %258 = vst.msk [vmem:[%s255 + $0x10] sm:$0x3] %vm184, %v224
      %259 = vst.msk [vmem:[%s255 + $0x18] sm:$0xff] %vm181, %v226
      %260 = vst.msk [vmem:[%s255 + $0x20] sm:$0xff] %vm181, %v228
      %261 = vst.msk [vmem:[%s255 + $0x28] sm:$0x3] %vm184, %v230
      %262 = vst.msk [vmem:[%s255 + $0x30] sm:$0xff] %vm181, %v232
      %263 = vst.msk [vmem:[%s255 + $0x38] sm:$0xff] %vm181, %v234
      %264 = vst.msk [vmem:[%s255 + $0x40] sm:$0x3] %vm184, %v236
      %265 = vst.msk [vmem:[%s255 + $0x48] sm:$0xff] %vm181, %v238
      %266 = vst.msk [vmem:[%s255 + $0x50] sm:$0xff] %vm181, %v240
      %267 = vst.msk [vmem:[%s255 + $0x58] sm:$0x3] %vm184, %v242
      %v268 = vld [vmem:[%s168] sm:$0xff]
      %v269 = vld [vmem:[%s168 + $0x8] sm:$0xff]
      %v270 = vld [vmem:[%s168 + $0x10] sm:$0x3]
      %v271 = vld [vmem:[%s168 + $0x18] sm:$0xff]
      %v272 = vld [vmem:[%s168 + $0x20] sm:$0xff]
      %v273 = vld [vmem:[%s168 + $0x28] sm:$0x3]
      %v274 = vld [vmem:[%s168 + $0x30] sm:$0xff]
      %v275 = vld [vmem:[%s168 + $0x38] sm:$0xff]
      %v276 = vld [vmem:[%s168 + $0x40] sm:$0x3]
      %v277 = vld [vmem:[%s168 + $0x48] sm:$0xff]
      %v278 = vld [vmem:[%s168 + $0x50] sm:$0xff]
      %v279 = vld [vmem:[%s168 + $0x58] sm:$0x3]
      %292 = vrot.lane.b32.xlu0 %v268, 126
      %v293 = vpop.permute.xlu0 %292
      %294 = vrot.lane.b32.xlu0 %v269, 126
      %v295 = vpop.permute.xlu0 %294
      %296 = vrot.lane.b32.xlu0 %v270, 126
      %v297 = vpop.permute.xlu0 %296
      %298 = vrot.lane.b32.xlu0 %v271, 126
      %v299 = vpop.permute.xlu0 %298
      %300 = vrot.lane.b32.xlu0 %v272, 126
      %v301 = vpop.permute.xlu0 %300
      %302 = vrot.lane.b32.xlu0 %v273, 126
      %v303 = vpop.permute.xlu0 %302
      %304 = vrot.lane.b32.xlu0 %v274, 126
      %v305 = vpop.permute.xlu0 %304
      %306 = vrot.lane.b32.xlu0 %v275, 126
      %v307 = vpop.permute.xlu0 %306
      %308 = vrot.lane.b32.xlu0 %v276, 126
      %v309 = vpop.permute.xlu0 %308
      %310 = vrot.lane.b32.xlu0 %v277, 126
      %v311 = vpop.permute.xlu0 %310
      %312 = vrot.lane.b32.xlu0 %v278, 126
      %v313 = vpop.permute.xlu0 %312
      %314 = vrot.lane.b32.xlu0 %v279, 126
      %v315 = vpop.permute.xlu0 %314
      %s328 = scalar_lea.vmem [#allocation2], 192
      %329 = vst.msk [vmem:[%s328] sm:$0xff] %vm181, %v293
      %330 = vst.msk [vmem:[%s328 + $0x8] sm:$0xff] %vm181, %v295
      %331 = vst.msk [vmem:[%s328 + $0x10] sm:$0x3] %vm184, %v297
      %332 = vst.msk [vmem:[%s328 + $0x18] sm:$0xff] %vm181, %v299
      %333 = vst.msk [vmem:[%s328 + $0x20] sm:$0xff] %vm181, %v301
      %334 = vst.msk [vmem:[%s328 + $0x28] sm:$0x3] %vm184, %v303
      %335 = vst.msk [vmem:[%s328 + $0x30] sm:$0xff] %vm181, %v305
      %336 = vst.msk [vmem:[%s328 + $0x38] sm:$0xff] %vm181, %v307
      %337 = vst.msk [vmem:[%s328 + $0x40] sm:$0x3] %vm184, %v309
      %338 = vst.msk [vmem:[%s328 + $0x48] sm:$0xff] %vm181, %v311
      %339 = vst.msk [vmem:[%s328 + $0x50] sm:$0xff] %vm181, %v313
      %340 = vst.msk [vmem:[%s328 + $0x58] sm:$0x3] %vm184, %v315
      %v341 = vld [vmem:[#allocation2] sm:$0xff]
      %v342 = vld [vmem:[#allocation2 + $0x8] sm:$0xff]
      %v343 = vld [vmem:[#allocation2 + $0x18] sm:$0xff]
      %v344 = vld [vmem:[#allocation2 + $0x20] sm:$0xff]
      %v345 = vld [vmem:[#allocation2 + $0x30] sm:$0xff]
      %v346 = vld [vmem:[#allocation2 + $0x38] sm:$0xff]
      %v347 = vld [vmem:[#allocation2 + $0x48] sm:$0xff]
      %v348 = vld [vmem:[#allocation2 + $0x50] sm:$0xff]
      %v349 = vld [vmem:[#allocation2 + $0x60] sm:$0xff]
      %v350 = vld [vmem:[#allocation2 + $0x68] sm:$0xff]
      %v351 = vld [vmem:[#allocation2 + $0x78] sm:$0xff]
      %v352 = vld [vmem:[#allocation2 + $0x80] sm:$0xff]
      %v353 = vld [vmem:[#allocation2 + $0x90] sm:$0xff]
      %v354 = vld [vmem:[#allocation2 + $0x98] sm:$0xff]
      %v355 = vld [vmem:[#allocation2 + $0xa8] sm:$0xff]
      %v356 = vld [vmem:[#allocation2 + $0xb0] sm:$0xff]
      %v357 = vld [vmem:[#allocation2 + $0xc0] sm:$0xff]
      %v358 = vld [vmem:[#allocation2 + $0xc8] sm:$0xff]
      %v359 = vld [vmem:[#allocation2 + $0xd8] sm:$0xff]
      %v360 = vld [vmem:[#allocation2 + $0xe0] sm:$0xff]
      %v361 = vld [vmem:[#allocation2 + $0xf0] sm:$0xff]
      %v362 = vld [vmem:[#allocation2 + $0xf8] sm:$0xff]
      %v363 = vld [vmem:[#allocation2 + $0x108] sm:$0xff]
      %v364 = vld [vmem:[#allocation2 + $0x110] sm:$0xff]
      %v365 = vrot.slane %v345, 4
      %vm366 = vcmask 1047556
      %v367 = vsel %vm366, %v365, %v341
      %v368 = vrot.slane %v341, 4
      %v369 = vsel %vm366, %v345, %v368
      %v371 = vunpack.c.l.s4 1983009808
      %v372 = vunpack.c.0.s8 %v371
      %v373 = vperm.slane %v367, %v372
      %v375 = vunpack.c.l.s4 1983009808
      %v376 = vunpack.c.0.s8 %v375
      %v377 = vperm.slane %v369, %v376
      %v378 = vrot.slane %v347, 4
      %v379 = vsel %vm366, %v378, %v343
      %v380 = vrot.slane %v343, 4
      %v381 = vsel %vm366, %v347, %v380
      %v383 = vunpack.c.l.s4 1983009808
      %v384 = vunpack.c.0.s8 %v383
      %v385 = vperm.slane %v379, %v384
      %v387 = vunpack.c.l.s4 1983009808
      %v388 = vunpack.c.0.s8 %v387
      %v389 = vperm.slane %v381, %v388
      %v390 = vrot.slane %v353, 4
      %v391 = vsel %vm366, %v390, %v349
      %v392 = vrot.slane %v349, 4
      %v393 = vsel %vm366, %v353, %v392
      %v395 = vunpack.c.l.s4 1983009808
      %v396 = vunpack.c.0.s8 %v395
      %v397 = vperm.slane %v391, %v396
      %v399 = vunpack.c.l.s4 1983009808
      %v400 = vunpack.c.0.s8 %v399
      %v401 = vperm.slane %v393, %v400
      %v402 = vrot.slane %v355, 4
      %v403 = vsel %vm366, %v402, %v351
      %v404 = vrot.slane %v351, 4
      %v405 = vsel %vm366, %v355, %v404
      %v407 = vunpack.c.l.s4 1983009808
      %v408 = vunpack.c.0.s8 %v407
      %v409 = vperm.slane %v403, %v408
      %v411 = vunpack.c.l.s4 1983009808
      %v412 = vunpack.c.0.s8 %v411
      %v413 = vperm.slane %v405, %v412
      %v414 = vrot.slane %v385, 4
      %v415 = vsel %vm366, %v414, %v373
      %v416 = vrot.slane %v373, 4
      %v417 = vsel %vm366, %v385, %v416
      %v419 = vunpack.c.l.s4 1934713408
      %v420 = vunpack.c.0.s8 %v419
      %v421 = vperm.slane %v415, %v420
      %v423 = vunpack.c.l.s4 1934713408
      %v424 = vunpack.c.0.s8 %v423
      %v425 = vperm.slane %v417, %v424
      %v426 = vrot.slane %v389, 4
      %v427 = vsel %vm366, %v426, %v377
      %v428 = vrot.slane %v377, 4
      %v429 = vsel %vm366, %v389, %v428
      %v431 = vunpack.c.l.s4 1934713408
      %v432 = vunpack.c.0.s8 %v431
      %v433 = vperm.slane %v427, %v432
      %v435 = vunpack.c.l.s4 1934713408
      %v436 = vunpack.c.0.s8 %v435
      %v437 = vperm.slane %v429, %v436
      %v438 = vrot.slane %v409, 4
      %v439 = vsel %vm366, %v438, %v397
      %v440 = vrot.slane %v397, 4
      %v441 = vsel %vm366, %v409, %v440
      %v443 = vunpack.c.l.s4 1934713408
      %v444 = vunpack.c.0.s8 %v443
      %v445 = vperm.slane %v439, %v444
      %v447 = vunpack.c.l.s4 1934713408
      %v448 = vunpack.c.0.s8 %v447
      %v449 = vperm.slane %v441, %v448
      %v450 = vrot.slane %v413, 4
      %v451 = vsel %vm366, %v450, %v401
      %v452 = vrot.slane %v401, 4
      %v453 = vsel %vm366, %v413, %v452
      %v455 = vunpack.c.l.s4 1934713408
      %v456 = vunpack.c.0.s8 %v455
      %v457 = vperm.slane %v451, %v456
      %v459 = vunpack.c.l.s4 1934713408
      %v460 = vunpack.c.0.s8 %v459
      %v461 = vperm.slane %v453, %v460
      %v462 = vrot.slane %v445, 4
      %v463 = vsel %vm366, %v462, %v421
      %v464 = vrot.slane %v421, 4
      %v465 = vsel %vm366, %v445, %v464
      %v466 = vrot.slane %v449, 4
      %v467 = vsel %vm366, %v466, %v425
      %v468 = vrot.slane %v425, 4
      %v469 = vsel %vm366, %v449, %v468
      %v470 = vrot.slane %v457, 4
      %v471 = vsel %vm366, %v470, %v433
      %v472 = vrot.slane %v433, 4
      %v473 = vsel %vm366, %v457, %v472
      %v474 = vrot.slane %v461, 4
      %v475 = vsel %vm366, %v474, %v437
      %v476 = vrot.slane %v437, 4
      %v477 = vsel %vm366, %v461, %v476
      %v478 = vrot.slane %v361, 4
      %v479 = vsel %vm366, %v478, %v357
      %v480 = vrot.slane %v357, 4
      %v481 = vsel %vm366, %v361, %v480
      %v483 = vunpack.c.l.s4 1983009808
      %v484 = vunpack.c.0.s8 %v483
      %v485 = vperm.slane %v479, %v484
      %v487 = vunpack.c.l.s4 1983009808
      %v488 = vunpack.c.0.s8 %v487
      %v489 = vperm.slane %v481, %v488
      %v490 = vrot.slane %v363, 4
      %v491 = vsel %vm366, %v490, %v359
      %v492 = vrot.slane %v359, 4
      %v493 = vsel %vm366, %v363, %v492
      %v495 = vunpack.c.l.s4 1983009808
      %v496 = vunpack.c.0.s8 %v495
      %v497 = vperm.slane %v491, %v496
      %v499 = vunpack.c.l.s4 1983009808
      %v500 = vunpack.c.0.s8 %v499
      %v501 = vperm.slane %v493, %v500
      %v502 = vrot.slane %v497, 4
      %v503 = vsel %vm366, %v502, %v485
      %v504 = vrot.slane %v485, 4
      %v505 = vsel %vm366, %v497, %v504
      %v507 = vunpack.c.l.s4 1934713408
      %v508 = vunpack.c.0.s8 %v507
      %v509 = vperm.slane %v503, %v508
      %v511 = vunpack.c.l.s4 1934713408
      %v512 = vunpack.c.0.s8 %v511
      %v513 = vperm.slane %v505, %v512
      %v514 = vrot.slane %v501, 4
      %v515 = vsel %vm366, %v514, %v489
      %v516 = vrot.slane %v489, 4
      %v517 = vsel %vm366, %v501, %v516
      %v519 = vunpack.c.l.s4 1934713408
      %v520 = vunpack.c.0.s8 %v519
      %v521 = vperm.slane %v515, %v520
      %v523 = vunpack.c.l.s4 1934713408
      %v524 = vunpack.c.0.s8 %v523
      %v525 = vperm.slane %v517, %v524
      %v526 = vrot.slane %v509, 4
      %v527 = vsel %vm366, 0.0, %v526
      %v528 = vrot.slane %v513, 4
      %v529 = vsel %vm366, 0.0, %v528
      %v530 = vrot.slane %v521, 4
      %v531 = vsel %vm366, 0.0, %v530
      %v532 = vrot.slane %v525, 4
      %v533 = vsel %vm366, 0.0, %v532
      %v534 = vrot.slane %v346, 4
      %v535 = vsel %vm366, %v534, %v342
      %v536 = vrot.slane %v342, 4
      %v537 = vsel %vm366, %v346, %v536
      %v539 = vunpack.c.l.s4 1983009808
      %v540 = vunpack.c.0.s8 %v539
      %v541 = vperm.slane %v535, %v540
      %v543 = vunpack.c.l.s4 1983009808
      %v544 = vunpack.c.0.s8 %v543
      %v545 = vperm.slane %v537, %v544
      %v546 = vrot.slane %v348, 4
      %v547 = vsel %vm366, %v546, %v344
      %v548 = vrot.slane %v344, 4
      %v549 = vsel %vm366, %v348, %v548
      %v551 = vunpack.c.l.s4 1983009808
      %v552 = vunpack.c.0.s8 %v551
      %v553 = vperm.slane %v547, %v552
      %v555 = vunpack.c.l.s4 1983009808
      %v556 = vunpack.c.0.s8 %v555
      %v557 = vperm.slane %v549, %v556
      %v558 = vrot.slane %v354, 4
      %v559 = vsel %vm366, %v558, %v350
      %v560 = vrot.slane %v350, 4
      %v561 = vsel %vm366, %v354, %v560
      %v563 = vunpack.c.l.s4 1983009808
      %v564 = vunpack.c.0.s8 %v563
      %v565 = vperm.slane %v559, %v564
      %v567 = vunpack.c.l.s4 1983009808
      %v568 = vunpack.c.0.s8 %v567
      %v569 = vperm.slane %v561, %v568
      %v570 = vrot.slane %v356, 4
      %v571 = vsel %vm366, %v570, %v352
      %v572 = vrot.slane %v352, 4
      %v573 = vsel %vm366, %v356, %v572
      %v575 = vunpack.c.l.s4 1983009808
      %v576 = vunpack.c.0.s8 %v575
      %v577 = vperm.slane %v571, %v576
      %v579 = vunpack.c.l.s4 1983009808
      %v580 = vunpack.c.0.s8 %v579
      %v581 = vperm.slane %v573, %v580
      %v582 = vrot.slane %v553, 4
      %v583 = vsel %vm366, %v582, %v541
      %v584 = vrot.slane %v541, 4
      %v585 = vsel %vm366, %v553, %v584
      %v587 = vunpack.c.l.s4 1934713408
      %v588 = vunpack.c.0.s8 %v587
      %v589 = vperm.slane %v583, %v588
      %v591 = vunpack.c.l.s4 1934713408
      %v592 = vunpack.c.0.s8 %v591
      %v593 = vperm.slane %v585, %v592
      %v594 = vrot.slane %v557, 4
      %v595 = vsel %vm366, %v594, %v545
      %v596 = vrot.slane %v545, 4
      %v597 = vsel %vm366, %v557, %v596
      %v599 = vunpack.c.l.s4 1934713408
      %v600 = vunpack.c.0.s8 %v599
      %v601 = vperm.slane %v595, %v600
      %v603 = vunpack.c.l.s4 1934713408
      %v604 = vunpack.c.0.s8 %v603
      %v605 = vperm.slane %v597, %v604
      %v606 = vrot.slane %v577, 4
      %v607 = vsel %vm366, %v606, %v565
      %v608 = vrot.slane %v565, 4
      %v609 = vsel %vm366, %v577, %v608
      %v611 = vunpack.c.l.s4 1934713408
      %v612 = vunpack.c.0.s8 %v611
      %v613 = vperm.slane %v607, %v612
      %v615 = vunpack.c.l.s4 1934713408
      %v616 = vunpack.c.0.s8 %v615
      %v617 = vperm.slane %v609, %v616
      %v618 = vrot.slane %v581, 4
      %v619 = vsel %vm366, %v618, %v569
      %v620 = vrot.slane %v569, 4
      %v621 = vsel %vm366, %v581, %v620
      %v623 = vunpack.c.l.s4 1934713408
      %v624 = vunpack.c.0.s8 %v623
      %v625 = vperm.slane %v619, %v624
      %v627 = vunpack.c.l.s4 1934713408
      %v628 = vunpack.c.0.s8 %v627
      %v629 = vperm.slane %v621, %v628
      %v630 = vrot.slane %v613, 4
      %v631 = vsel %vm366, %v630, %v589
      %v632 = vrot.slane %v589, 4
      %v633 = vsel %vm366, %v613, %v632
      %v634 = vrot.slane %v617, 4
      %v635 = vsel %vm366, %v634, %v593
      %v636 = vrot.slane %v593, 4
      %v637 = vsel %vm366, %v617, %v636
      %v638 = vrot.slane %v625, 4
      %v639 = vsel %vm366, %v638, %v601
      %v640 = vrot.slane %v601, 4
      %v641 = vsel %vm366, %v625, %v640
      %v642 = vrot.slane %v629, 4
      %v643 = vsel %vm366, %v642, %v605
      %v644 = vrot.slane %v605, 4
      %v645 = vsel %vm366, %v629, %v644
      %v646 = vrot.slane %v362, 4
      %v647 = vsel %vm366, %v646, %v358
      %v648 = vrot.slane %v358, 4
      %v649 = vsel %vm366, %v362, %v648
      %v651 = vunpack.c.l.s4 1983009808
      %v652 = vunpack.c.0.s8 %v651
      %v653 = vperm.slane %v647, %v652
      %v655 = vunpack.c.l.s4 1983009808
      %v656 = vunpack.c.0.s8 %v655
      %v657 = vperm.slane %v649, %v656
      %v658 = vrot.slane %v364, 4
      %v659 = vsel %vm366, %v658, %v360
      %v660 = vrot.slane %v360, 4
      %v661 = vsel %vm366, %v364, %v660
      %v663 = vunpack.c.l.s4 1983009808
      %v664 = vunpack.c.0.s8 %v663
      %v665 = vperm.slane %v659, %v664
      %v667 = vunpack.c.l.s4 1983009808
      %v668 = vunpack.c.0.s8 %v667
      %v669 = vperm.slane %v661, %v668
      %v670 = vrot.slane %v665, 4
      %v671 = vsel %vm366, %v670, %v653
      %v672 = vrot.slane %v653, 4
      %v673 = vsel %vm366, %v665, %v672
      %v675 = vunpack.c.l.s4 1934713408
      %v676 = vunpack.c.0.s8 %v675
      %v677 = vperm.slane %v671, %v676
      %v679 = vunpack.c.l.s4 1934713408
      %v680 = vunpack.c.0.s8 %v679
      %v681 = vperm.slane %v673, %v680
      %v682 = vrot.slane %v669, 4
      %v683 = vsel %vm366, %v682, %v657
      %v684 = vrot.slane %v657, 4
      %v685 = vsel %vm366, %v669, %v684
      %v687 = vunpack.c.l.s4 1934713408
      %v688 = vunpack.c.0.s8 %v687
      %v689 = vperm.slane %v683, %v688
      %v691 = vunpack.c.l.s4 1934713408
      %v692 = vunpack.c.0.s8 %v691
      %v693 = vperm.slane %v685, %v692
      %v694 = vrot.slane %v677, 4
      %v695 = vsel %vm366, 0.0, %v694
      %v696 = vrot.slane %v681, 4
      %v697 = vsel %vm366, 0.0, %v696
      %v698 = vrot.slane %v689, 4
      %v699 = vsel %vm366, 0.0, %v698
      %v700 = vrot.slane %v693, 4
      %v701 = vsel %vm366, 0.0, %v700
      %704 = vrot.lane.b32.xlu0 %v465, 16
      %v705 = vpop.permute.xlu0 %704
      %706 = vrot.lane.b32.xlu0 %v527, 16
      %v707 = vpop.permute.xlu0 %706
      %712 = vrot.lane.b32.xlu0 %v467, 32
      %v713 = vpop.permute.xlu0 %712
      %714 = vrot.lane.b32.xlu0 %v513, 32
      %v715 = vpop.permute.xlu0 %714
      %720 = vrot.lane.b32.xlu0 %v469, 48
      %v721 = vpop.permute.xlu0 %720
      %722 = vrot.lane.b32.xlu0 %v529, 48
      %v723 = vpop.permute.xlu0 %722
      %728 = vrot.lane.b32.xlu0 %v471, 64
      %v729 = vpop.permute.xlu0 %728
      %730 = vrot.lane.b32.xlu0 %v521, 64
      %v731 = vpop.permute.xlu0 %730
      %736 = vrot.lane.b32.xlu0 %v473, 80
      %v737 = vpop.permute.xlu0 %736
      %738 = vrot.lane.b32.xlu0 %v531, 80
      %v739 = vpop.permute.xlu0 %738
      %744 = vrot.lane.b32.xlu0 %v475, 96
      %v745 = vpop.permute.xlu0 %744
      %746 = vrot.lane.b32.xlu0 %v525, 96
      %v747 = vpop.permute.xlu0 %746
      %752 = vrot.lane.b32.xlu0 %v477, 112
      %v753 = vpop.permute.xlu0 %752
      %754 = vrot.lane.b32.xlu0 %v533, 112
      %v755 = vpop.permute.xlu0 %754
      %760 = vrot.lane.b32.xlu0 %v633, 16
      %v761 = vpop.permute.xlu0 %760
      %762 = vrot.lane.b32.xlu0 %v695, 16
      %v763 = vpop.permute.xlu0 %762
      %768 = vrot.lane.b32.xlu0 %v635, 32
      %v769 = vpop.permute.xlu0 %768
      %770 = vrot.lane.b32.xlu0 %v681, 32
      %v771 = vpop.permute.xlu0 %770
      %776 = vrot.lane.b32.xlu0 %v637, 48
      %v777 = vpop.permute.xlu0 %776
      %778 = vrot.lane.b32.xlu0 %v697, 48
      %v779 = vpop.permute.xlu0 %778
      %784 = vrot.lane.b32.xlu0 %v639, 64
      %v785 = vpop.permute.xlu0 %784
      %786 = vrot.lane.b32.xlu0 %v689, 64
      %v787 = vpop.permute.xlu0 %786
      %792 = vrot.lane.b32.xlu0 %v641, 80
      %v793 = vpop.permute.xlu0 %792
      %794 = vrot.lane.b32.xlu0 %v699, 80
      %v795 = vpop.permute.xlu0 %794
      %800 = vrot.lane.b32.xlu0 %v643, 96
      %v801 = vpop.permute.xlu0 %800
      %802 = vrot.lane.b32.xlu0 %v693, 96
      %v803 = vpop.permute.xlu0 %802
      %808 = vrot.lane.b32.xlu0 %v645, 112
      %v809 = vpop.permute.xlu0 %808
      %810 = vrot.lane.b32.xlu0 %v701, 112
      %v811 = vpop.permute.xlu0 %810
      %v814 = vsel %vm181, %v463, %v705
      %v815 = vsel %vm181, %v509, %v707
      %vm816 = vcmask 261120
      %v817 = vsel %vm816, %v814, %v713
      %v818 = vsel %vm816, %v815, %v715
      %vm819 = vcmask 392192
      %v820 = vsel %vm819, %v817, %v721
      %v821 = vsel %vm819, %v818, %v723
      %vm822 = vcmask 523264
      %v823 = vsel %vm822, %v820, %v729
      %v824 = vsel %vm822, %v821, %v731
      %vm825 = vcmask 654336
      %v826 = vsel %vm825, %v823, %v737
      %v827 = vsel %vm825, %v824, %v739
      %vm828 = vcmask 785408
      %v829 = vsel %vm828, %v826, %v745
      %v830 = vsel %vm828, %v827, %v747
      %vm831 = vcmask 916480
      %v832 = vsel %vm831, %v829, %v753
      %v833 = vsel %vm831, %v830, %v755
      %v834 = vsel %vm181, %v631, %v761
      %v835 = vsel %vm181, %v677, %v763
      %v836 = vsel %vm816, %v834, %v769
      %v837 = vsel %vm816, %v835, %v771
      %v838 = vsel %vm819, %v836, %v777
      %v839 = vsel %vm819, %v837, %v779
      %v840 = vsel %vm822, %v838, %v785
      %v841 = vsel %vm822, %v839, %v787
      %v842 = vsel %vm825, %v840, %v793
      %v843 = vsel %vm825, %v841, %v795
      %v844 = vsel %vm828, %v842, %v801
      %v845 = vsel %vm828, %v843, %v803
      %v846 = vsel %vm831, %v844, %v809
      %v847 = vsel %vm831, %v845, %v811
      %848 = vst [vmem:[#allocation3] sm:$0xff] %v832
      %849 = vst [vmem:[#allocation3 + $0x8] sm:$0xff] %v846
      %850 = vst [vmem:[#allocation3 + $0x10] sm:$0xf] %v833
      %851 = vst [vmem:[#allocation3 + $0x18] sm:$0xf] %v847
      %v852 = vld [vmem:[#allocation2 + $0x1] sm:$0xff]
      %v853 = vld [vmem:[#allocation2 + $0x9] sm:$0xff]
      %v854 = vld [vmem:[#allocation2 + $0x19] sm:$0xff]
      %v855 = vld [vmem:[#allocation2 + $0x21] sm:$0xff]
      %v856 = vld [vmem:[#allocation2 + $0x31] sm:$0xff]
      %v857 = vld [vmem:[#allocation2 + $0x39] sm:$0xff]
      %v858 = vld [vmem:[#allocation2 + $0x49] sm:$0xff]
      %v859 = vld [vmem:[#allocation2 + $0x51] sm:$0xff]
      %v860 = vld [vmem:[#allocation2 + $0x61] sm:$0xff]
      %v861 = vld [vmem:[#allocation2 + $0x69] sm:$0xff]
      %v862 = vld [vmem:[#allocation2 + $0x79] sm:$0xff]
      %v863 = vld [vmem:[#allocation2 + $0x81] sm:$0xff]
      %v864 = vld [vmem:[#allocation2 + $0x91] sm:$0xff]
      %v865 = vld [vmem:[#allocation2 + $0x99] sm:$0xff]
      %v866 = vld [vmem:[#allocation2 + $0xa9] sm:$0xff]
      %v867 = vld [vmem:[#allocation2 + $0xb1] sm:$0xff]
      %v868 = vld [vmem:[#allocation2 + $0xc1] sm:$0xff]
      %v869 = vld [vmem:[#allocation2 + $0xc9] sm:$0xff]
      %v870 = vld [vmem:[#allocation2 + $0xd9] sm:$0xff]
      %v871 = vld [vmem:[#allocation2 + $0xe1] sm:$0xff]
      %v872 = vld [vmem:[#allocation2 + $0xf1] sm:$0xff]
      %v873 = vld [vmem:[#allocation2 + $0xf9] sm:$0xff]
      %v874 = vld [vmem:[#allocation2 + $0x109] sm:$0xff]
      %v875 = vld [vmem:[#allocation2 + $0x111] sm:$0xff]
      %v876 = vrot.slane %v856, 4
      %v877 = vsel %vm366, %v876, %v852
      %v878 = vrot.slane %v852, 4
      %v879 = vsel %vm366, %v856, %v878
      %v881 = vunpack.c.l.s4 1983009808
      %v882 = vunpack.c.0.s8 %v881
      %v883 = vperm.slane %v877, %v882
      %v885 = vunpack.c.l.s4 1983009808
      %v886 = vunpack.c.0.s8 %v885
      %v887 = vperm.slane %v879, %v886
      %v888 = vrot.slane %v858, 4
      %v889 = vsel %vm366, %v888, %v854
      %v890 = vrot.slane %v854, 4
      %v891 = vsel %vm366, %v858, %v890
      %v893 = vunpack.c.l.s4 1983009808
      %v894 = vunpack.c.0.s8 %v893
      %v895 = vperm.slane %v889, %v894
      %v897 = vunpack.c.l.s4 1983009808
      %v898 = vunpack.c.0.s8 %v897
      %v899 = vperm.slane %v891, %v898
      %v900 = vrot.slane %v864, 4
      %v901 = vsel %vm366, %v900, %v860
      %v902 = vrot.slane %v860, 4
      %v903 = vsel %vm366, %v864, %v902
      %v905 = vunpack.c.l.s4 1983009808
      %v906 = vunpack.c.0.s8 %v905
      %v907 = vperm.slane %v901, %v906
      %v909 = vunpack.c.l.s4 1983009808
      %v910 = vunpack.c.0.s8 %v909
      %v911 = vperm.slane %v903, %v910
      %v912 = vrot.slane %v866, 4
      %v913 = vsel %vm366, %v912, %v862
      %v914 = vrot.slane %v862, 4
      %v915 = vsel %vm366, %v866, %v914
      %v917 = vunpack.c.l.s4 1983009808
      %v918 = vunpack.c.0.s8 %v917
      %v919 = vperm.slane %v913, %v918
      %v921 = vunpack.c.l.s4 1983009808
      %v922 = vunpack.c.0.s8 %v921
      %v923 = vperm.slane %v915, %v922
      %v924 = vrot.slane %v895, 4
      %v925 = vsel %vm366, %v924, %v883
      %v926 = vrot.slane %v883, 4
      %v927 = vsel %vm366, %v895, %v926
      %v929 = vunpack.c.l.s4 1934713408
      %v930 = vunpack.c.0.s8 %v929
      %v931 = vperm.slane %v925, %v930
      %v933 = vunpack.c.l.s4 1934713408
      %v934 = vunpack.c.0.s8 %v933
      %v935 = vperm.slane %v927, %v934
      %v936 = vrot.slane %v899, 4
      %v937 = vsel %vm366, %v936, %v887
      %v938 = vrot.slane %v887, 4
      %v939 = vsel %vm366, %v899, %v938
      %v941 = vunpack.c.l.s4 1934713408
      %v942 = vunpack.c.0.s8 %v941
      %v943 = vperm.slane %v937, %v942
      %v945 = vunpack.c.l.s4 1934713408
      %v946 = vunpack.c.0.s8 %v945
      %v947 = vperm.slane %v939, %v946
      %v948 = vrot.slane %v919, 4
      %v949 = vsel %vm366, %v948, %v907
      %v950 = vrot.slane %v907, 4
      %v951 = vsel %vm366, %v919, %v950
      %v953 = vunpack.c.l.s4 1934713408
      %v954 = vunpack.c.0.s8 %v953
      %v955 = vperm.slane %v949, %v954
      %v957 = vunpack.c.l.s4 1934713408
      %v958 = vunpack.c.0.s8 %v957
      %v959 = vperm.slane %v951, %v958
      %v960 = vrot.slane %v923, 4
      %v961 = vsel %vm366, %v960, %v911
      %v962 = vrot.slane %v911, 4
      %v963 = vsel %vm366, %v923, %v962
      %v965 = vunpack.c.l.s4 1934713408
      %v966 = vunpack.c.0.s8 %v965
      %v967 = vperm.slane %v961, %v966
      %v969 = vunpack.c.l.s4 1934713408
      %v970 = vunpack.c.0.s8 %v969
      %v971 = vperm.slane %v963, %v970
      %v972 = vrot.slane %v955, 4
      %v973 = vsel %vm366, %v972, %v931
      %v974 = vrot.slane %v931, 4
      %v975 = vsel %vm366, %v955, %v974
      %v976 = vrot.slane %v959, 4
      %v977 = vsel %vm366, %v976, %v935
      %v978 = vrot.slane %v935, 4
      %v979 = vsel %vm366, %v959, %v978
      %v980 = vrot.slane %v967, 4
      %v981 = vsel %vm366, %v980, %v943
      %v982 = vrot.slane %v943, 4
      %v983 = vsel %vm366, %v967, %v982
      %v984 = vrot.slane %v971, 4
      %v985 = vsel %vm366, %v984, %v947
      %v986 = vrot.slane %v947, 4
      %v987 = vsel %vm366, %v971, %v986
      %v988 = vrot.slane %v872, 4
      %v989 = vsel %vm366, %v988, %v868
      %v990 = vrot.slane %v868, 4
      %v991 = vsel %vm366, %v872, %v990
      %v993 = vunpack.c.l.s4 1983009808
      %v994 = vunpack.c.0.s8 %v993
      %v995 = vperm.slane %v989, %v994
      %v997 = vunpack.c.l.s4 1983009808
      %v998 = vunpack.c.0.s8 %v997
      %v999 = vperm.slane %v991, %v998
      %v1000 = vrot.slane %v874, 4
      %v1001 = vsel %vm366, %v1000, %v870
      %v1002 = vrot.slane %v870, 4
      %v1003 = vsel %vm366, %v874, %v1002
      %v1005 = vunpack.c.l.s4 1983009808
      %v1006 = vunpack.c.0.s8 %v1005
      %v1007 = vperm.slane %v1001, %v1006
      %v1009 = vunpack.c.l.s4 1983009808
      %v1010 = vunpack.c.0.s8 %v1009
      %v1011 = vperm.slane %v1003, %v1010
      %v1012 = vrot.slane %v1007, 4
      %v1013 = vsel %vm366, %v1012, %v995
      %v1014 = vrot.slane %v995, 4
      %v1015 = vsel %vm366, %v1007, %v1014
      %v1017 = vunpack.c.l.s4 1934713408
      %v1018 = vunpack.c.0.s8 %v1017
      %v1019 = vperm.slane %v1013, %v1018
      %v1021 = vunpack.c.l.s4 1934713408
      %v1022 = vunpack.c.0.s8 %v1021
      %v1023 = vperm.slane %v1015, %v1022
      %v1024 = vrot.slane %v1011, 4
      %v1025 = vsel %vm366, %v1024, %v999
      %v1026 = vrot.slane %v999, 4
      %v1027 = vsel %vm366, %v1011, %v1026
      %v1029 = vunpack.c.l.s4 1934713408
      %v1030 = vunpack.c.0.s8 %v1029
      %v1031 = vperm.slane %v1025, %v1030
      %v1033 = vunpack.c.l.s4 1934713408
      %v1034 = vunpack.c.0.s8 %v1033
      %v1035 = vperm.slane %v1027, %v1034
      %v1036 = vrot.slane %v1019, 4
      %v1037 = vsel %vm366, 0.0, %v1036
      %v1038 = vrot.slane %v1023, 4
      %v1039 = vsel %vm366, 0.0, %v1038
      %v1040 = vrot.slane %v1031, 4
      %v1041 = vsel %vm366, 0.0, %v1040
      %v1042 = vrot.slane %v1035, 4
      %v1043 = vsel %vm366, 0.0, %v1042
      %v1044 = vrot.slane %v857, 4
      %v1045 = vsel %vm366, %v1044, %v853
      %v1046 = vrot.slane %v853, 4
      %v1047 = vsel %vm366, %v857, %v1046
      %v1049 = vunpack.c.l.s4 1983009808
      %v1050 = vunpack.c.0.s8 %v1049
      %v1051 = vperm.slane %v1045, %v1050
      %v1053 = vunpack.c.l.s4 1983009808
      %v1054 = vunpack.c.0.s8 %v1053
      %v1055 = vperm.slane %v1047, %v1054
      %v1056 = vrot.slane %v859, 4
      %v1057 = vsel %vm366, %v1056, %v855
      %v1058 = vrot.slane %v855, 4
      %v1059 = vsel %vm366, %v859, %v1058
      %v1061 = vunpack.c.l.s4 1983009808
      %v1062 = vunpack.c.0.s8 %v1061
      %v1063 = vperm.slane %v1057, %v1062
      %v1065 = vunpack.c.l.s4 1983009808
      %v1066 = vunpack.c.0.s8 %v1065
      %v1067 = vperm.slane %v1059, %v1066
      %v1068 = vrot.slane %v865, 4
      %v1069 = vsel %vm366, %v1068, %v861
      %v1070 = vrot.slane %v861, 4
      %v1071 = vsel %vm366, %v865, %v1070
      %v1073 = vunpack.c.l.s4 1983009808
      %v1074 = vunpack.c.0.s8 %v1073
      %v1075 = vperm.slane %v1069, %v1074
      %v1077 = vunpack.c.l.s4 1983009808
      %v1078 = vunpack.c.0.s8 %v1077
      %v1079 = vperm.slane %v1071, %v1078
      %v1080 = vrot.slane %v867, 4
      %v1081 = vsel %vm366, %v1080, %v863
      %v1082 = vrot.slane %v863, 4
      %v1083 = vsel %vm366, %v867, %v1082
      %v1085 = vunpack.c.l.s4 1983009808
      %v1086 = vunpack.c.0.s8 %v1085
      %v1087 = vperm.slane %v1081, %v1086
      %v1089 = vunpack.c.l.s4 1983009808
      %v1090 = vunpack.c.0.s8 %v1089
      %v1091 = vperm.slane %v1083, %v1090
      %v1092 = vrot.slane %v1063, 4
      %v1093 = vsel %vm366, %v1092, %v1051
      %v1094 = vrot.slane %v1051, 4
      %v1095 = vsel %vm366, %v1063, %v1094
      %v1097 = vunpack.c.l.s4 1934713408
      %v1098 = vunpack.c.0.s8 %v1097
      %v1099 = vperm.slane %v1093, %v1098
      %v1101 = vunpack.c.l.s4 1934713408
      %v1102 = vunpack.c.0.s8 %v1101
      %v1103 = vperm.slane %v1095, %v1102
      %v1104 = vrot.slane %v1067, 4
      %v1105 = vsel %vm366, %v1104, %v1055
      %v1106 = vrot.slane %v1055, 4
      %v1107 = vsel %vm366, %v1067, %v1106
      %v1109 = vunpack.c.l.s4 1934713408
      %v1110 = vunpack.c.0.s8 %v1109
      %v1111 = vperm.slane %v1105, %v1110
      %v1113 = vunpack.c.l.s4 1934713408
      %v1114 = vunpack.c.0.s8 %v1113
      %v1115 = vperm.slane %v1107, %v1114
      %v1116 = vrot.slane %v1087, 4
      %v1117 = vsel %vm366, %v1116, %v1075
      %v1118 = vrot.slane %v1075, 4
      %v1119 = vsel %vm366, %v1087, %v1118
      %v1121 = vunpack.c.l.s4 1934713408
      %v1122 = vunpack.c.0.s8 %v1121
      %v1123 = vperm.slane %v1117, %v1122
      %v1125 = vunpack.c.l.s4 1934713408
      %v1126 = vunpack.c.0.s8 %v1125
      %v1127 = vperm.slane %v1119, %v1126
      %v1128 = vrot.slane %v1091, 4
      %v1129 = vsel %vm366, %v1128, %v1079
      %v1130 = vrot.slane %v1079, 4
      %v1131 = vsel %vm366, %v1091, %v1130
      %v1133 = vunpack.c.l.s4 1934713408
      %v1134 = vunpack.c.0.s8 %v1133
      %v1135 = vperm.slane %v1129, %v1134
      %v1137 = vunpack.c.l.s4 1934713408
      %v1138 = vunpack.c.0.s8 %v1137
      %v1139 = vperm.slane %v1131, %v1138
      %v1140 = vrot.slane %v1123, 4
      %v1141 = vsel %vm366, %v1140, %v1099
      %v1142 = vrot.slane %v1099, 4
      %v1143 = vsel %vm366, %v1123, %v1142
      %v1144 = vrot.slane %v1127, 4
      %v1145 = vsel %vm366, %v1144, %v1103
      %v1146 = vrot.slane %v1103, 4
      %v1147 = vsel %vm366, %v1127, %v1146
      %v1148 = vrot.slane %v1135, 4
      %v1149 = vsel %vm366, %v1148, %v1111
      %v1150 = vrot.slane %v1111, 4
      %v1151 = vsel %vm366, %v1135, %v1150
      %v1152 = vrot.slane %v1139, 4
      %v1153 = vsel %vm366, %v1152, %v1115
      %v1154 = vrot.slane %v1115, 4
      %v1155 = vsel %vm366, %v1139, %v1154
      %v1156 = vrot.slane %v873, 4
      %v1157 = vsel %vm366, %v1156, %v869
      %v1158 = vrot.slane %v869, 4
      %v1159 = vsel %vm366, %v873, %v1158
      %v1161 = vunpack.c.l.s4 1983009808
      %v1162 = vunpack.c.0.s8 %v1161
      %v1163 = vperm.slane %v1157, %v1162
      %v1165 = vunpack.c.l.s4 1983009808
      %v1166 = vunpack.c.0.s8 %v1165
      %v1167 = vperm.slane %v1159, %v1166
      %v1168 = vrot.slane %v875, 4
      %v1169 = vsel %vm366, %v1168, %v871
      %v1170 = vrot.slane %v871, 4
      %v1171 = vsel %vm366, %v875, %v1170
      %v1173 = vunpack.c.l.s4 1983009808
      %v1174 = vunpack.c.0.s8 %v1173
      %v1175 = vperm.slane %v1169, %v1174
      %v1177 = vunpack.c.l.s4 1983009808
      %v1178 = vunpack.c.0.s8 %v1177
      %v1179 = vperm.slane %v1171, %v1178
      %v1180 = vrot.slane %v1175, 4
      %v1181 = vsel %vm366, %v1180, %v1163
      %v1182 = vrot.slane %v1163, 4
      %v1183 = vsel %vm366, %v1175, %v1182
      %v1185 = vunpack.c.l.s4 1934713408
      %v1186 = vunpack.c.0.s8 %v1185
      %v1187 = vperm.slane %v1181, %v1186
      %v1189 = vunpack.c.l.s4 1934713408
      %v1190 = vunpack.c.0.s8 %v1189
      %v1191 = vperm.slane %v1183, %v1190
      %v1192 = vrot.slane %v1179, 4
      %v1193 = vsel %vm366, %v1192, %v1167
      %v1194 = vrot.slane %v1167, 4
      %v1195 = vsel %vm366, %v1179, %v1194
      %v1197 = vunpack.c.l.s4 1934713408
      %v1198 = vunpack.c.0.s8 %v1197
      %v1199 = vperm.slane %v1193, %v1198
      %v1201 = vunpack.c.l.s4 1934713408
      %v1202 = vunpack.c.0.s8 %v1201
      %v1203 = vperm.slane %v1195, %v1202
      %v1204 = vrot.slane %v1187, 4
      %v1205 = vsel %vm366, 0.0, %v1204
      %v1206 = vrot.slane %v1191, 4
      %v1207 = vsel %vm366, 0.0, %v1206
      %v1208 = vrot.slane %v1199, 4
      %v1209 = vsel %vm366, 0.0, %v1208
      %v1210 = vrot.slane %v1203, 4
      %v1211 = vsel %vm366, 0.0, %v1210
      %1214 = vrot.lane.b32.xlu0 %v975, 16
      %v1215 = vpop.permute.xlu0 %1214
      %1216 = vrot.lane.b32.xlu0 %v1037, 16
      %v1217 = vpop.permute.xlu0 %1216
      %1222 = vrot.lane.b32.xlu0 %v977, 32
      %v1223 = vpop.permute.xlu0 %1222
      %1224 = vrot.lane.b32.xlu0 %v1023, 32
      %v1225 = vpop.permute.xlu0 %1224
      %1230 = vrot.lane.b32.xlu0 %v979, 48
      %v1231 = vpop.permute.xlu0 %1230
      %1232 = vrot.lane.b32.xlu0 %v1039, 48
      %v1233 = vpop.permute.xlu0 %1232
      %1238 = vrot.lane.b32.xlu0 %v981, 64
      %v1239 = vpop.permute.xlu0 %1238
      %1240 = vrot.lane.b32.xlu0 %v1031, 64
      %v1241 = vpop.permute.xlu0 %1240
      %1246 = vrot.lane.b32.xlu0 %v983, 80
      %v1247 = vpop.permute.xlu0 %1246
      %1248 = vrot.lane.b32.xlu0 %v1041, 80
      %v1249 = vpop.permute.xlu0 %1248
      %1254 = vrot.lane.b32.xlu0 %v985, 96
      %v1255 = vpop.permute.xlu0 %1254
      %1256 = vrot.lane.b32.xlu0 %v1035, 96
      %v1257 = vpop.permute.xlu0 %1256
      %1262 = vrot.lane.b32.xlu0 %v987, 112
      %v1263 = vpop.permute.xlu0 %1262
      %1264 = vrot.lane.b32.xlu0 %v1043, 112
      %v1265 = vpop.permute.xlu0 %1264
      %1270 = vrot.lane.b32.xlu0 %v1143, 16
      %v1271 = vpop.permute.xlu0 %1270
      %1272 = vrot.lane.b32.xlu0 %v1205, 16
      %v1273 = vpop.permute.xlu0 %1272
      %1278 = vrot.lane.b32.xlu0 %v1145, 32
      %v1279 = vpop.permute.xlu0 %1278
      %1280 = vrot.lane.b32.xlu0 %v1191, 32
      %v1281 = vpop.permute.xlu0 %1280
      %1286 = vrot.lane.b32.xlu0 %v1147, 48
      %v1287 = vpop.permute.xlu0 %1286
      %1288 = vrot.lane.b32.xlu0 %v1207, 48
      %v1289 = vpop.permute.xlu0 %1288
      %1294 = vrot.lane.b32.xlu0 %v1149, 64
      %v1295 = vpop.permute.xlu0 %1294
      %1296 = vrot.lane.b32.xlu0 %v1199, 64
      %v1297 = vpop.permute.xlu0 %1296
      %1302 = vrot.lane.b32.xlu0 %v1151, 80
      %v1303 = vpop.permute.xlu0 %1302
      %1304 = vrot.lane.b32.xlu0 %v1209, 80
      %v1305 = vpop.permute.xlu0 %1304
      %1310 = vrot.lane.b32.xlu0 %v1153, 96
      %v1311 = vpop.permute.xlu0 %1310
      %1312 = vrot.lane.b32.xlu0 %v1203, 96
      %v1313 = vpop.permute.xlu0 %1312
      %1318 = vrot.lane.b32.xlu0 %v1155, 112
      %v1319 = vpop.permute.xlu0 %1318
      %1320 = vrot.lane.b32.xlu0 %v1211, 112
      %v1321 = vpop.permute.xlu0 %1320
      %v1324 = vsel %vm181, %v973, %v1215
      %v1325 = vsel %vm181, %v1019, %v1217
      %v1326 = vsel %vm816, %v1324, %v1223
      %v1327 = vsel %vm816, %v1325, %v1225
      %v1328 = vsel %vm819, %v1326, %v1231
      %v1329 = vsel %vm819, %v1327, %v1233
      %v1330 = vsel %vm822, %v1328, %v1239
      %v1331 = vsel %vm822, %v1329, %v1241
      %v1332 = vsel %vm825, %v1330, %v1247
      %v1333 = vsel %vm825, %v1331, %v1249
      %v1334 = vsel %vm828, %v1332, %v1255
      %v1335 = vsel %vm828, %v1333, %v1257
      %v1336 = vsel %vm831, %v1334, %v1263
      %v1337 = vsel %vm831, %v1335, %v1265
      %v1338 = vsel %vm181, %v1141, %v1271
      %v1339 = vsel %vm181, %v1187, %v1273
      %v1340 = vsel %vm816, %v1338, %v1279
      %v1341 = vsel %vm816, %v1339, %v1281
      %v1342 = vsel %vm819, %v1340, %v1287
      %v1343 = vsel %vm819, %v1341, %v1289
      %v1344 = vsel %vm822, %v1342, %v1295
      %v1345 = vsel %vm822, %v1343, %v1297
      %v1346 = vsel %vm825, %v1344, %v1303
      %v1347 = vsel %vm825, %v1345, %v1305
      %v1348 = vsel %vm828, %v1346, %v1311
      %v1349 = vsel %vm828, %v1347, %v1313
      %v1350 = vsel %vm831, %v1348, %v1319
      %v1351 = vsel %vm831, %v1349, %v1321
      %vm1356 = vcmask 1043456
      %v1357 = vrot.slane %v1336, 4
      %v1358 = vrot.slane %v1350, 4
      %v1359 = vrot.slane %v1337, 4
      %v1360 = vsel %vm1356, %v1357, %v1359
      %v1361 = vrot.slane %v1351, 4
      %v1362 = vsel %vm1356, %v1358, %v1361
      %1367 = vst [vmem:[#allocation3 + $0x10] sm:$0xf0] %v1357
      %1368 = vst [vmem:[#allocation3 + $0x18] sm:$0xf0] %v1358
      %1369 = vst [vmem:[#allocation3 + $0x20] sm:$0xff] %v1360
      %1370 = vst [vmem:[#allocation3 + $0x28] sm:$0xff] %v1362
      %v1371 = vld [vmem:[#allocation2 + $0x2] sm:$0xff]
      %v1372 = vld [vmem:[#allocation2 + $0xa] sm:$0xff]
      %v1373 = vld [vmem:[#allocation2 + $0x1a] sm:$0xff]
      %v1374 = vld [vmem:[#allocation2 + $0x22] sm:$0xff]
      %v1375 = vld [vmem:[#allocation2 + $0x32] sm:$0xff]
      %v1376 = vld [vmem:[#allocation2 + $0x3a] sm:$0xff]
      %v1377 = vld [vmem:[#allocation2 + $0x4a] sm:$0xff]
      %v1378 = vld [vmem:[#allocation2 + $0x52] sm:$0xff]
      %v1379 = vld [vmem:[#allocation2 + $0x62] sm:$0xff]
      %v1380 = vld [vmem:[#allocation2 + $0x6a] sm:$0xff]
      %v1381 = vld [vmem:[#allocation2 + $0x7a] sm:$0xff]
      %v1382 = vld [vmem:[#allocation2 + $0x82] sm:$0xff]
      %v1383 = vld [vmem:[#allocation2 + $0x92] sm:$0xff]
      %v1384 = vld [vmem:[#allocation2 + $0x9a] sm:$0xff]
      %v1385 = vld [vmem:[#allocation2 + $0xaa] sm:$0xff]
      %v1386 = vld [vmem:[#allocation2 + $0xb2] sm:$0xff]
      %v1387 = vld [vmem:[#allocation2 + $0xc2] sm:$0xff]
      %v1388 = vld [vmem:[#allocation2 + $0xca] sm:$0xff]
      %v1389 = vld [vmem:[#allocation2 + $0xda] sm:$0xff]
      %v1390 = vld [vmem:[#allocation2 + $0xe2] sm:$0xff]
      %v1391 = vld [vmem:[#allocation2 + $0xf2] sm:$0xff]
      %v1392 = vld [vmem:[#allocation2 + $0xfa] sm:$0xff]
      %v1393 = vld [vmem:[#allocation2 + $0x10a] sm:$0xff]
      %v1394 = vld [vmem:[#allocation2 + $0x112] sm:$0xff]
      %v1395 = vrot.slane %v1375, 4
      %v1396 = vsel %vm366, %v1395, %v1371
      %v1397 = vrot.slane %v1371, 4
      %v1398 = vsel %vm366, %v1375, %v1397
      %v1400 = vunpack.c.l.s4 1983009808
      %v1401 = vunpack.c.0.s8 %v1400
      %v1402 = vperm.slane %v1396, %v1401
      %v1404 = vunpack.c.l.s4 1983009808
      %v1405 = vunpack.c.0.s8 %v1404
      %v1406 = vperm.slane %v1398, %v1405
      %v1407 = vrot.slane %v1377, 4
      %v1408 = vsel %vm366, %v1407, %v1373
      %v1409 = vrot.slane %v1373, 4
      %v1410 = vsel %vm366, %v1377, %v1409
      %v1412 = vunpack.c.l.s4 1983009808
      %v1413 = vunpack.c.0.s8 %v1412
      %v1414 = vperm.slane %v1408, %v1413
      %v1416 = vunpack.c.l.s4 1983009808
      %v1417 = vunpack.c.0.s8 %v1416
      %v1418 = vperm.slane %v1410, %v1417
      %v1419 = vrot.slane %v1383, 4
      %v1420 = vsel %vm366, %v1419, %v1379
      %v1421 = vrot.slane %v1379, 4
      %v1422 = vsel %vm366, %v1383, %v1421
      %v1424 = vunpack.c.l.s4 1983009808
      %v1425 = vunpack.c.0.s8 %v1424
      %v1426 = vperm.slane %v1420, %v1425
      %v1428 = vunpack.c.l.s4 1983009808
      %v1429 = vunpack.c.0.s8 %v1428
      %v1430 = vperm.slane %v1422, %v1429
      %v1431 = vrot.slane %v1385, 4
      %v1432 = vsel %vm366, %v1431, %v1381
      %v1433 = vrot.slane %v1381, 4
      %v1434 = vsel %vm366, %v1385, %v1433
      %v1436 = vunpack.c.l.s4 1983009808
      %v1437 = vunpack.c.0.s8 %v1436
      %v1438 = vperm.slane %v1432, %v1437
      %v1440 = vunpack.c.l.s4 1983009808
      %v1441 = vunpack.c.0.s8 %v1440
      %v1442 = vperm.slane %v1434, %v1441
      %v1443 = vrot.slane %v1414, 4
      %v1444 = vsel %vm366, %v1443, %v1402
      %v1445 = vrot.slane %v1402, 4
      %v1446 = vsel %vm366, %v1414, %v1445
      %v1448 = vunpack.c.l.s4 1934713408
      %v1449 = vunpack.c.0.s8 %v1448
      %v1450 = vperm.slane %v1444, %v1449
      %v1452 = vunpack.c.l.s4 1934713408
      %v1453 = vunpack.c.0.s8 %v1452
      %v1454 = vperm.slane %v1446, %v1453
      %v1455 = vrot.slane %v1418, 4
      %v1456 = vsel %vm366, %v1455, %v1406
      %v1457 = vrot.slane %v1406, 4
      %v1458 = vsel %vm366, %v1418, %v1457
      %v1460 = vunpack.c.l.s4 1934713408
      %v1461 = vunpack.c.0.s8 %v1460
      %v1462 = vperm.slane %v1456, %v1461
      %v1464 = vunpack.c.l.s4 1934713408
      %v1465 = vunpack.c.0.s8 %v1464
      %v1466 = vperm.slane %v1458, %v1465
      %v1467 = vrot.slane %v1438, 4
      %v1468 = vsel %vm366, %v1467, %v1426
      %v1469 = vrot.slane %v1426, 4
      %v1470 = vsel %vm366, %v1438, %v1469
      %v1472 = vunpack.c.l.s4 1934713408
      %v1473 = vunpack.c.0.s8 %v1472
      %v1474 = vperm.slane %v1468, %v1473
      %v1476 = vunpack.c.l.s4 1934713408
      %v1477 = vunpack.c.0.s8 %v1476
      %v1478 = vperm.slane %v1470, %v1477
      %v1479 = vrot.slane %v1442, 4
      %v1480 = vsel %vm366, %v1479, %v1430
      %v1481 = vrot.slane %v1430, 4
      %v1482 = vsel %vm366, %v1442, %v1481
      %v1484 = vunpack.c.l.s4 1934713408
      %v1485 = vunpack.c.0.s8 %v1484
      %v1486 = vperm.slane %v1480, %v1485
      %v1488 = vunpack.c.l.s4 1934713408
      %v1489 = vunpack.c.0.s8 %v1488
      %v1490 = vperm.slane %v1482, %v1489
      %v1491 = vrot.slane %v1474, 4
      %v1492 = vsel %vm366, %v1491, %v1450
      %v1493 = vrot.slane %v1450, 4
      %v1494 = vsel %vm366, %v1474, %v1493
      %v1495 = vrot.slane %v1478, 4
      %v1496 = vsel %vm366, %v1495, %v1454
      %v1497 = vrot.slane %v1454, 4
      %v1498 = vsel %vm366, %v1478, %v1497
      %v1499 = vrot.slane %v1486, 4
      %v1500 = vsel %vm366, %v1499, %v1462
      %v1501 = vrot.slane %v1462, 4
      %v1502 = vsel %vm366, %v1486, %v1501
      %v1503 = vrot.slane %v1490, 4
      %v1504 = vsel %vm366, %v1503, %v1466
      %v1505 = vrot.slane %v1466, 4
      %v1506 = vsel %vm366, %v1490, %v1505
      %v1507 = vrot.slane %v1391, 4
      %v1508 = vsel %vm366, %v1507, %v1387
      %v1509 = vrot.slane %v1387, 4
      %v1510 = vsel %vm366, %v1391, %v1509
      %v1512 = vunpack.c.l.s4 1983009808
      %v1513 = vunpack.c.0.s8 %v1512
      %v1514 = vperm.slane %v1508, %v1513
      %v1516 = vunpack.c.l.s4 1983009808
      %v1517 = vunpack.c.0.s8 %v1516
      %v1518 = vperm.slane %v1510, %v1517
      %v1519 = vrot.slane %v1393, 4
      %v1520 = vsel %vm366, %v1519, %v1389
      %v1521 = vrot.slane %v1389, 4
      %v1522 = vsel %vm366, %v1393, %v1521
      %v1524 = vunpack.c.l.s4 1983009808
      %v1525 = vunpack.c.0.s8 %v1524
      %v1526 = vperm.slane %v1520, %v1525
      %v1528 = vunpack.c.l.s4 1983009808
      %v1529 = vunpack.c.0.s8 %v1528
      %v1530 = vperm.slane %v1522, %v1529
      %v1531 = vrot.slane %v1526, 4
      %v1532 = vsel %vm366, %v1531, %v1514
      %v1533 = vrot.slane %v1514, 4
      %v1534 = vsel %vm366, %v1526, %v1533
      %v1536 = vunpack.c.l.s4 1934713408
      %v1537 = vunpack.c.0.s8 %v1536
      %v1538 = vperm.slane %v1532, %v1537
      %v1540 = vunpack.c.l.s4 1934713408
      %v1541 = vunpack.c.0.s8 %v1540
      %v1542 = vperm.slane %v1534, %v1541
      %v1543 = vrot.slane %v1530, 4
      %v1544 = vsel %vm366, %v1543, %v1518
      %v1545 = vrot.slane %v1518, 4
      %v1546 = vsel %vm366, %v1530, %v1545
      %v1548 = vunpack.c.l.s4 1934713408
      %v1549 = vunpack.c.0.s8 %v1548
      %v1550 = vperm.slane %v1544, %v1549
      %v1552 = vunpack.c.l.s4 1934713408
      %v1553 = vunpack.c.0.s8 %v1552
      %v1554 = vperm.slane %v1546, %v1553
      %v1555 = vrot.slane %v1538, 4
      %v1556 = vsel %vm366, 0.0, %v1555
      %v1557 = vrot.slane %v1542, 4
      %v1558 = vsel %vm366, 0.0, %v1557
      %v1559 = vrot.slane %v1550, 4
      %v1560 = vsel %vm366, 0.0, %v1559
      %v1561 = vrot.slane %v1554, 4
      %v1562 = vsel %vm366, 0.0, %v1561
      %v1563 = vrot.slane %v1376, 4
      %v1564 = vsel %vm366, %v1563, %v1372
      %v1565 = vrot.slane %v1372, 4
      %v1566 = vsel %vm366, %v1376, %v1565
      %v1568 = vunpack.c.l.s4 1983009808
      %v1569 = vunpack.c.0.s8 %v1568
      %v1570 = vperm.slane %v1564, %v1569
      %v1572 = vunpack.c.l.s4 1983009808
      %v1573 = vunpack.c.0.s8 %v1572
      %v1574 = vperm.slane %v1566, %v1573
      %v1575 = vrot.slane %v1378, 4
      %v1576 = vsel %vm366, %v1575, %v1374
      %v1577 = vrot.slane %v1374, 4
      %v1578 = vsel %vm366, %v1378, %v1577
      %v1580 = vunpack.c.l.s4 1983009808
      %v1581 = vunpack.c.0.s8 %v1580
      %v1582 = vperm.slane %v1576, %v1581
      %v1584 = vunpack.c.l.s4 1983009808
      %v1585 = vunpack.c.0.s8 %v1584
      %v1586 = vperm.slane %v1578, %v1585
      %v1587 = vrot.slane %v1384, 4
      %v1588 = vsel %vm366, %v1587, %v1380
      %v1589 = vrot.slane %v1380, 4
      %v1590 = vsel %vm366, %v1384, %v1589
      %v1592 = vunpack.c.l.s4 1983009808
      %v1593 = vunpack.c.0.s8 %v1592
      %v1594 = vperm.slane %v1588, %v1593
      %v1596 = vunpack.c.l.s4 1983009808
      %v1597 = vunpack.c.0.s8 %v1596
      %v1598 = vperm.slane %v1590, %v1597
      %v1599 = vrot.slane %v1386, 4
      %v1600 = vsel %vm366, %v1599, %v1382
      %v1601 = vrot.slane %v1382, 4
      %v1602 = vsel %vm366, %v1386, %v1601
      %v1604 = vunpack.c.l.s4 1983009808
      %v1605 = vunpack.c.0.s8 %v1604
      %v1606 = vperm.slane %v1600, %v1605
      %v1608 = vunpack.c.l.s4 1983009808
      %v1609 = vunpack.c.0.s8 %v1608
      %v1610 = vperm.slane %v1602, %v1609
      %v1611 = vrot.slane %v1582, 4
      %v1612 = vsel %vm366, %v1611, %v1570
      %v1613 = vrot.slane %v1570, 4
      %v1614 = vsel %vm366, %v1582, %v1613
      %v1616 = vunpack.c.l.s4 1934713408
      %v1617 = vunpack.c.0.s8 %v1616
      %v1618 = vperm.slane %v1612, %v1617
      %v1620 = vunpack.c.l.s4 1934713408
      %v1621 = vunpack.c.0.s8 %v1620
      %v1622 = vperm.slane %v1614, %v1621
      %v1623 = vrot.slane %v1586, 4
      %v1624 = vsel %vm366, %v1623, %v1574
      %v1625 = vrot.slane %v1574, 4
      %v1626 = vsel %vm366, %v1586, %v1625
      %v1628 = vunpack.c.l.s4 1934713408
      %v1629 = vunpack.c.0.s8 %v1628
      %v1630 = vperm.slane %v1624, %v1629
      %v1632 = vunpack.c.l.s4 1934713408
      %v1633 = vunpack.c.0.s8 %v1632
      %v1634 = vperm.slane %v1626, %v1633
      %v1635 = vrot.slane %v1606, 4
      %v1636 = vsel %vm366, %v1635, %v1594
      %v1637 = vrot.slane %v1594, 4
      %v1638 = vsel %vm366, %v1606, %v1637
      %v1640 = vunpack.c.l.s4 1934713408
      %v1641 = vunpack.c.0.s8 %v1640
      %v1642 = vperm.slane %v1636, %v1641
      %v1644 = vunpack.c.l.s4 1934713408
      %v1645 = vunpack.c.0.s8 %v1644
      %v1646 = vperm.slane %v1638, %v1645
      %v1647 = vrot.slane %v1610, 4
      %v1648 = vsel %vm366, %v1647, %v1598
      %v1649 = vrot.slane %v1598, 4
      %v1650 = vsel %vm366, %v1610, %v1649
      %v1652 = vunpack.c.l.s4 1934713408
      %v1653 = vunpack.c.0.s8 %v1652
      %v1654 = vperm.slane %v1648, %v1653
      %v1656 = vunpack.c.l.s4 1934713408
      %v1657 = vunpack.c.0.s8 %v1656
      %v1658 = vperm.slane %v1650, %v1657
      %v1659 = vrot.slane %v1642, 4
      %v1660 = vsel %vm366, %v1659, %v1618
      %v1661 = vrot.slane %v1618, 4
      %v1662 = vsel %vm366, %v1642, %v1661
      %v1663 = vrot.slane %v1646, 4
      %v1664 = vsel %vm366, %v1663, %v1622
      %v1665 = vrot.slane %v1622, 4
      %v1666 = vsel %vm366, %v1646, %v1665
      %v1667 = vrot.slane %v1654, 4
      %v1668 = vsel %vm366, %v1667, %v1630
      %v1669 = vrot.slane %v1630, 4
      %v1670 = vsel %vm366, %v1654, %v1669
      %v1671 = vrot.slane %v1658, 4
      %v1672 = vsel %vm366, %v1671, %v1634
      %v1673 = vrot.slane %v1634, 4
      %v1674 = vsel %vm366, %v1658, %v1673
      %v1675 = vrot.slane %v1392, 4
      %v1676 = vsel %vm366, %v1675, %v1388
      %v1677 = vrot.slane %v1388, 4
      %v1678 = vsel %vm366, %v1392, %v1677
      %v1680 = vunpack.c.l.s4 1983009808
      %v1681 = vunpack.c.0.s8 %v1680
      %v1682 = vperm.slane %v1676, %v1681
      %v1684 = vunpack.c.l.s4 1983009808
      %v1685 = vunpack.c.0.s8 %v1684
      %v1686 = vperm.slane %v1678, %v1685
      %v1687 = vrot.slane %v1394, 4
      %v1688 = vsel %vm366, %v1687, %v1390
      %v1689 = vrot.slane %v1390, 4
      %v1690 = vsel %vm366, %v1394, %v1689
      %v1692 = vunpack.c.l.s4 1983009808
      %v1693 = vunpack.c.0.s8 %v1692
      %v1694 = vperm.slane %v1688, %v1693
      %v1696 = vunpack.c.l.s4 1983009808
      %v1697 = vunpack.c.0.s8 %v1696
      %v1698 = vperm.slane %v1690, %v1697
      %v1699 = vrot.slane %v1694, 4
      %v1700 = vsel %vm366, %v1699, %v1682
      %v1701 = vrot.slane %v1682, 4
      %v1702 = vsel %vm366, %v1694, %v1701
      %v1704 = vunpack.c.l.s4 1934713408
      %v1705 = vunpack.c.0.s8 %v1704
      %v1706 = vperm.slane %v1700, %v1705
      %v1708 = vunpack.c.l.s4 1934713408
      %v1709 = vunpack.c.0.s8 %v1708
      %v1710 = vperm.slane %v1702, %v1709
      %v1711 = vrot.slane %v1698, 4
      %v1712 = vsel %vm366, %v1711, %v1686
      %v1713 = vrot.slane %v1686, 4
      %v1714 = vsel %vm366, %v1698, %v1713
      %v1716 = vunpack.c.l.s4 1934713408
      %v1717 = vunpack.c.0.s8 %v1716
      %v1718 = vperm.slane %v1712, %v1717
      %v1720 = vunpack.c.l.s4 1934713408
      %v1721 = vunpack.c.0.s8 %v1720
      %v1722 = vperm.slane %v1714, %v1721
      %v1723 = vrot.slane %v1706, 4
      %v1724 = vsel %vm366, 0.0, %v1723
      %v1725 = vrot.slane %v1710, 4
      %v1726 = vsel %vm366, 0.0, %v1725
      %v1727 = vrot.slane %v1718, 4
      %v1728 = vsel %vm366, 0.0, %v1727
      %v1729 = vrot.slane %v1722, 4
      %v1730 = vsel %vm366, 0.0, %v1729
      %1733 = vrot.lane.b32.xlu0 %v1494, 16
      %v1734 = vpop.permute.xlu0 %1733
      %1735 = vrot.lane.b32.xlu0 %v1556, 16
      %v1736 = vpop.permute.xlu0 %1735
      %1741 = vrot.lane.b32.xlu0 %v1496, 32
      %v1742 = vpop.permute.xlu0 %1741
      %1743 = vrot.lane.b32.xlu0 %v1542, 32
      %v1744 = vpop.permute.xlu0 %1743
      %1749 = vrot.lane.b32.xlu0 %v1498, 48
      %v1750 = vpop.permute.xlu0 %1749
      %1751 = vrot.lane.b32.xlu0 %v1558, 48
      %v1752 = vpop.permute.xlu0 %1751
      %1757 = vrot.lane.b32.xlu0 %v1500, 64
      %v1758 = vpop.permute.xlu0 %1757
      %1759 = vrot.lane.b32.xlu0 %v1550, 64
      %v1760 = vpop.permute.xlu0 %1759
      %1765 = vrot.lane.b32.xlu0 %v1502, 80
      %v1766 = vpop.permute.xlu0 %1765
      %1767 = vrot.lane.b32.xlu0 %v1560, 80
      %v1768 = vpop.permute.xlu0 %1767
      %1773 = vrot.lane.b32.xlu0 %v1504, 96
      %v1774 = vpop.permute.xlu0 %1773
      %1775 = vrot.lane.b32.xlu0 %v1554, 96
      %v1776 = vpop.permute.xlu0 %1775
      %1781 = vrot.lane.b32.xlu0 %v1506, 112
      %v1782 = vpop.permute.xlu0 %1781
      %1783 = vrot.lane.b32.xlu0 %v1562, 112
      %v1784 = vpop.permute.xlu0 %1783
      %1789 = vrot.lane.b32.xlu0 %v1662, 16
      %v1790 = vpop.permute.xlu0 %1789
      %1791 = vrot.lane.b32.xlu0 %v1724, 16
      %v1792 = vpop.permute.xlu0 %1791
      %1797 = vrot.lane.b32.xlu0 %v1664, 32
      %v1798 = vpop.permute.xlu0 %1797
      %1799 = vrot.lane.b32.xlu0 %v1710, 32
      %v1800 = vpop.permute.xlu0 %1799
      %1805 = vrot.lane.b32.xlu0 %v1666, 48
      %v1806 = vpop.permute.xlu0 %1805
      %1807 = vrot.lane.b32.xlu0 %v1726, 48
      %v1808 = vpop.permute.xlu0 %1807
      %1813 = vrot.lane.b32.xlu0 %v1668, 64
      %v1814 = vpop.permute.xlu0 %1813
      %1815 = vrot.lane.b32.xlu0 %v1718, 64
      %v1816 = vpop.permute.xlu0 %1815
      %1821 = vrot.lane.b32.xlu0 %v1670, 80
      %v1822 = vpop.permute.xlu0 %1821
      %1823 = vrot.lane.b32.xlu0 %v1728, 80
      %v1824 = vpop.permute.xlu0 %1823
      %1829 = vrot.lane.b32.xlu0 %v1672, 96
      %v1830 = vpop.permute.xlu0 %1829
      %1831 = vrot.lane.b32.xlu0 %v1722, 96
      %v1832 = vpop.permute.xlu0 %1831
      %1837 = vrot.lane.b32.xlu0 %v1674, 112
      %v1838 = vpop.permute.xlu0 %1837
      %1839 = vrot.lane.b32.xlu0 %v1730, 112
      %v1840 = vpop.permute.xlu0 %1839
      %v1843 = vsel %vm181, %v1492, %v1734
      %v1844 = vsel %vm181, %v1538, %v1736
      %v1845 = vsel %vm816, %v1843, %v1742
      %v1846 = vsel %vm816, %v1844, %v1744
      %v1847 = vsel %vm819, %v1845, %v1750
      %v1848 = vsel %vm819, %v1846, %v1752
      %v1849 = vsel %vm822, %v1847, %v1758
      %v1850 = vsel %vm822, %v1848, %v1760
      %v1851 = vsel %vm825, %v1849, %v1766
      %v1852 = vsel %vm825, %v1850, %v1768
      %v1853 = vsel %vm828, %v1851, %v1774
      %v1854 = vsel %vm828, %v1852, %v1776
      %v1855 = vsel %vm831, %v1853, %v1782
      %v1856 = vsel %vm831, %v1854, %v1784
      %v1857 = vsel %vm181, %v1660, %v1790
      %v1858 = vsel %vm181, %v1706, %v1792
      %v1859 = vsel %vm816, %v1857, %v1798
      %v1860 = vsel %vm816, %v1858, %v1800
      %v1861 = vsel %vm819, %v1859, %v1806
      %v1862 = vsel %vm819, %v1860, %v1808
      %v1863 = vsel %vm822, %v1861, %v1814
      %v1864 = vsel %vm822, %v1862, %v1816
      %v1865 = vsel %vm825, %v1863, %v1822
      %v1866 = vsel %vm825, %v1864, %v1824
      %v1867 = vsel %vm828, %v1865, %v1830
      %v1868 = vsel %vm828, %v1866, %v1832
      %v1869 = vsel %vm831, %v1867, %v1838
      %v1870 = vsel %vm831, %v1868, %v1840
      %1871 = vst [vmem:[#allocation3 + $0x30] sm:$0xff] %v1855
      %1872 = vst [vmem:[#allocation3 + $0x38] sm:$0xff] %v1869
      %1873 = vst [vmem:[#allocation3 + $0x40] sm:$0xf] %v1856
      %1874 = vst [vmem:[#allocation3 + $0x48] sm:$0xf] %v1870
      %v1875 = vlaneseq
      %vm1876 = vcmp.ge.s32.totalorder %v1875, 0
      %vm1877 = vcmp.lt.s32.totalorder %v1875, 256
      %vm1878 = vmand %vm1876, %vm1877
      %s1879 = scalar_lea.vmem [#allocation3], 68
      %1880 = vst.msk [vmem:[%s1879] ss:$8 sm:$0x3] %vm1878, 1.0
      %1881 = vst.msk [vmem:[%s1879] ss:$8 sm:$0x0] %vm1878, 1.0
      %v1882 = vld [vmem:[%s1] sm:$0xff]
      %v1883 = vld [vmem:[#allocation3] sm:$0xff]
      %v1884 = vld [vmem:[#allocation3 + $0x8] sm:$0xff]
      %v1885 = vld [vmem:[#allocation3 + $0x10] sm:$0xff]
      %v1886 = vld [vmem:[#allocation3 + $0x18] sm:$0xff]
      %v1887 = vld [vmem:[#allocation3 + $0x20] sm:$0xff]
      %v1888 = vld [vmem:[#allocation3 + $0x28] sm:$0xff]
      %v1889 = vld [vmem:[#allocation3 + $0x30] sm:$0xff]
      %v1890 = vld [vmem:[#allocation3 + $0x38] sm:$0xff]
      %v1891 = vld [vmem:[#allocation3 + $0x40] sm:$0x1f]
      %v1892 = vld [vmem:[#allocation3 + $0x48] sm:$0x1f]
      %vm1893 = vcmask 302080
      %v1895 = vsel %vm1893, %v1882, 0
      %vm1897 = vcmask 1044480
      %v1899 = vsel %vm1897, %v1891, 0
      %v1902 = vsel %vm1897, %v1892, 0
      %1904 = vmatpush.msra.mxu0 0.0
      %1905 = vmatpush.msra.mxu0 0.0
      %1906 = vmatpush.msra.mxu0 0.0
      %1907 = vmatpush.msra.mxu0 0.0
      %1908 = vmatpush.msra.mxu0 0.0
      %1909 = vmatpush.msra.mxu0 0.0
      %1910 = vmatpush.msra.mxu0 0.0
      %1911 = vmatpush.msra.mxu0 0.0
      %1912 = vmatpush.msra.mxu0 0.0
      %1913 = vmatpush.msra.mxu0 0.0
      %1914 = vmatpush.msra.mxu0 0.0
      %1915 = vmatpush.msra.mxu0 %v1899
      %1916 = vmatpush.msra.mxu0 %v1889
      %1917 = vmatpush.msra.mxu0 %v1887
      %1918 = vmatpush.msra.mxu0 %v1885
      %1919 = vmatpush.msra.mxu0 %v1883
      %1920 = vmatmul.f32.gmra.mxu0 %v1895
      %v1921 = vpop.f32.mrf.mxu0
      %v1922 = vadd.f32 0.0, %v1921
      %1923 = vdwg.mxu0
      %1924 = vmatpush.msra.mxu0 0.0
      %1925 = vmatpush.msra.mxu0 0.0
      %1926 = vmatpush.msra.mxu0 0.0
      %1927 = vmatpush.msra.mxu0 0.0
      %1928 = vmatpush.msra.mxu0 0.0
      %1929 = vmatpush.msra.mxu0 0.0
      %1930 = vmatpush.msra.mxu0 0.0
      %1931 = vmatpush.msra.mxu0 0.0
      %1932 = vmatpush.msra.mxu0 0.0
      %1933 = vmatpush.msra.mxu0 0.0
      %1934 = vmatpush.msra.mxu0 0.0
      %1935 = vmatpush.msra.mxu0 %v1902
      %1936 = vmatpush.msra.mxu0 %v1890
      %1937 = vmatpush.msra.mxu0 %v1888
      %1938 = vmatpush.msra.mxu0 %v1886
      %1939 = vmatpush.msra.mxu0 %v1884
      %1940 = vmatmul.f32.gmra.mxu0 %v1895
      %v1941 = vpop.f32.mrf.mxu0
      %v1942 = vadd.f32 0.0, %v1941
      %1943 = vdwg.mxu0
      %v1944 = vmul.f32 %v1922, 0.5
      %v1945 = vmul.f32 %v1942, 0.5
      %v1946 = vmul.f32 %v1922, 0.70710677
      %v1947 = vmul.f32 %v1942, 0.70710677
      %v1948 = vmul.f32 %v1946, %v1946
      %v1949 = vmin.f32 16.0, %v1948
      %v1950 = vmul.f32 %v1949, 2.1237322e-06
      %v1951 = vadd.f32 %v1950, 0.00028619796
      %v1952 = vmul.f32 %v1949, %v1951
      %v1953 = vadd.f32 %v1952, 0.0036580483
      %v1954 = vmul.f32 %v1949, %v1953
      %v1955 = vadd.f32 %v1954, 0.05243302
      %v1956 = vmul.f32 %v1949, %v1955
      %v1957 = vadd.f32 %v1956, 0.18741608
      %v1958 = vmul.f32 %v1949, %v1957
      %v1959 = vadd.f32 %v1958, 1.1283791
      %v1960 = vmul.f32 %v1946, %v1959
      %v1961 = vmul.f32 %v1949, 3.8918573e-05
      %v1962 = vadd.f32 %v1961, 0.001143296
      %v1963 = vmul.f32 %v1949, %v1962
      %v1964 = vadd.f32 %v1963, 0.014752088
      %v1965 = vmul.f32 %v1949, %v1964
      %v1966 = vadd.f32 %v1965, 0.112945676
      %v1967 = vmul.f32 %v1949, %v1966
      %v1968 = vadd.f32 %v1967, 0.4994258
      %v1969 = vmul.f32 %v1949, %v1968
      %v1970 = vadd.f32 %v1969, 1.0
      %v1971 = vrcp.pop %v1970
      %v1972 = vmul.f32 %v1970, %v1971
      %v1973 = vsub.f32 1.0, %v1972
      %v1974 = vmul.f32 %v1971, %v1973
      %v1975 = vadd.f32 %v1971, %v1974
      %vm1976 = vweird.f32 %v1970
      %vm1977 = vweird.f32 %v1971
      %vm1978 = vmor %vm1976, %vm1977
      %v1979 = vsel %vm1978, %v1971, %v1975
      %v1980 = vand.u32 2147483647, %v1970
      %vm1981 = vcmp.eq.f32.partialorder %v1980, 8.507059e+37
      %v1982 = vand.u32 %v1970, 2147483648
      %v1983 = vor.u32 1.1754944e-38, %v1982
      %v1984 = vsel %vm1981, %v1983, %v1979
      %v1985 = vmul.f32 %v1960, %v1984
      %v1986 = vmin.f32 %v1985, 1.0
      %v1987 = vmax.f32 %v1986, -1.0
      %v1988 = vmul.f32 %v1947, %v1947
      %v1989 = vmin.f32 16.0, %v1988
      %v1990 = vmul.f32 %v1989, 2.1237322e-06
      %v1991 = vadd.f32 %v1990, 0.00028619796
      %v1992 = vmul.f32 %v1989, %v1991
      %v1993 = vadd.f32 %v1992, 0.0036580483
      %v1994 = vmul.f32 %v1989, %v1993
      %v1995 = vadd.f32 %v1994, 0.05243302
      %v1996 = vmul.f32 %v1989, %v1995
      %v1997 = vadd.f32 %v1996, 0.18741608
      %v1998 = vmul.f32 %v1989, %v1997
      %v1999 = vadd.f32 %v1998, 1.1283791
      %v2000 = vmul.f32 %v1947, %v1999
      %v2001 = vmul.f32 %v1989, 3.8918573e-05
      %v2002 = vadd.f32 %v2001, 0.001143296
      %v2003 = vmul.f32 %v1989, %v2002
      %v2004 = vadd.f32 %v2003, 0.014752088
      %v2005 = vmul.f32 %v1989, %v2004
      %v2006 = vadd.f32 %v2005, 0.112945676
      %v2007 = vmul.f32 %v1989, %v2006
      %v2008 = vadd.f32 %v2007, 0.4994258
      %v2009 = vmul.f32 %v1989, %v2008
      %v2010 = vadd.f32 %v2009, 1.0
      %v2011 = vrcp.pop %v2010
      %v2012 = vmul.f32 %v2010, %v2011
      %v2013 = vsub.f32 1.0, %v2012
      %v2014 = vmul.f32 %v2011, %v2013
      %v2015 = vadd.f32 %v2011, %v2014
      %vm2016 = vweird.f32 %v2010
      %vm2017 = vweird.f32 %v2011
      %vm2018 = vmor %vm2016, %vm2017
      %v2019 = vsel %vm2018, %v2011, %v2015
      %v2020 = vand.u32 2147483647, %v2010
      %vm2021 = vcmp.eq.f32.partialorder %v2020, 8.507059e+37
      %v2022 = vand.u32 %v2010, 2147483648
      %v2023 = vor.u32 1.1754944e-38, %v2022
      %v2024 = vsel %vm2021, %v2023, %v2019
      %v2025 = vmul.f32 %v2000, %v2024
      %v2026 = vmin.f32 %v2025, 1.0
      %v2027 = vmax.f32 %v2026, -1.0
      %v2028 = vadd.f32 %v1987, 1.0
      %v2029 = vadd.f32 %v2027, 1.0
      %v2030 = vmul.f32 %v1944, %v2028
      %v2031 = vmul.f32 %v1945, %v2029
      %2032 = vst [vmem:[%s165] sm:$0xff] %v2030
      %2033 = vst [vmem:[%s165 + $0x8] sm:$0xff] %v2031
      %s2034 = smul.u32 2, %s18
      %p2035 = scmp.lt.s32.totalorder %s17, 1
      %s2036 = scalar_select %p2035, %s17, 1
      %p2037 = scmp.lt.s32.totalorder %s2034, 1
      %s2038 = scalar_select %p2037, %s2034, 1
      %s2039 = smul.addr %s2036, 2
      %s2040 = sadd.s32 %s2038, %s2039
      %s2041 = smul.addr %s2040, 8
      %s2042 = scalar_lea.vmem %s2, %s2041
      // Predicated region
      $region29: #{basic_conv_forward.1} parent=27 // pred_check
        %p2043 = pneg %p92
      $region30: #{basic_conv_forward.1} parent=27 // pred_check_branch
        %2045 = sbr.rel (%p2043) target = $region32
      $region31: #{basic_conv_forward.1} parent=27 // pred_region
        %s2046 = smul.u32 2, %s18
      $region32: #{basic_conv_forward.1} parent=27 // pred_fallthru
        _
    $region28: #{basic_conv_forward.1} parent=5 // pred_fallthru
      _
    %p2047 = scmp.le.s32.totalorder 2, %s8
    // Predicated region
    $region33: #{basic_conv_forward.1} parent=5 // pred_check
      %p2048 = pneg %p2047
    $region34: #{basic_conv_forward.1} parent=5 // pred_check_branch
      %2050 = sbr.rel (%p2048) target = $region36
    $region35: #{basic_conv_forward.1} parent=5 // pred_region
      %s2051 = ssub.s32 %s8, 2
      // Predicated region
      $region37: #{basic_conv_forward.1} parent=35 // pred_check
        %p2052 = pneg %p98
      $region38: #{basic_conv_forward.1} parent=35 // pred_check_branch
        %2054 = sbr.rel (%p2052) target = $region40
      $region39: #{basic_conv_forward.1} parent=35 // pred_region
        %s2055 = smul.u32 2, %s20
        %p2056 = scmp.lt.s32.totalorder %s19, 1
        %s2057 = scalar_select %p2056, %s19, 1
        %p2058 = scmp.lt.s32.totalorder %s2055, 1
        %s2059 = scalar_select %p2058, %s2055, 1
        %s2060 = smul.addr %s2057, 2
        %s2061 = sadd.s32 %s2059, %s2060
        %s2062 = smul.addr %s2061, 8
        %s2063 = scalar_lea.vmem %s2, %s2062
      $region40: #{basic_conv_forward.1} parent=35 // pred_fallthru
        _
    $region36: #{basic_conv_forward.1} parent=5 // pred_fallthru
      _
  $region6: #{basic_conv_forward.1} parent=0 // loop_footer
    %s12 = sadd.s32 1, %s8
  $region7: #{basic_conv_forward.1} parent=0 // loop_footer_branch
    %7 = sbr.rel target = $region3
  $region8: #{basic_conv_forward.1} parent=0 // loop_exit
    _

</llo_original>
